<compile_context>
chip_gen: v7x
topology: tpu7x:2x2x1
jax: 0.10.0
libtpu: 0.0.40
codegen_flags: <defaults>
</compile_context>

<pallas_src>
import jax
import jax.numpy as jnp
from jax.experimental import pallas as pl
from jax.experimental.pallas import tpu as pltpu


def _fused_head_kernel(feat_ref, w_ref, b_ref, out_ref):
    # feat_ref: (TILE_N, C, HW) raw NCHW block (spatial flattened), source dtype.
    # w_ref:    (C, OUT_PAD) fused [W1^T | W2^T | 0-pad] weight, pre-scaled by 1/HW, f32.
    # b_ref:    (1, OUT_PAD) fused bias, f32.
    # out_ref:  (TILE_N, OUT_PAD) f32, lane-dense (OUT_PAD is a multiple of 128).

    # avg_pool2d(., 8).view(-1, 640): spatial mean. The 1/HW factor lives in w_ref, so here
    # we only sum over HW with f32 accumulation (no materialized f32 copy of the tile).
    pooled = jnp.sum(feat_ref[...], axis=-1, dtype=jnp.float32)        # (TILE_N, C)

    # Both linear heads fused into one lane-dense MXU matmul + bias.
    out = jnp.dot(pooled, w_ref[...], preferred_element_type=jnp.float32) + b_ref[...]
    out_ref[...] = out.astype(out_ref.dtype)


def two_head_wide_forward(x_nchw, w1, b1, w2, b2, *, tile_n=32):
    """x_nchw: (N, 640, 8, 8) backbone features (NCHW, like PyTorch).
       w1: (C1, 640), b1: (C1,)   -- PyTorch nn.Linear convention (out, in)
       w2: (C2, 640), b2: (C2,)
       Returns (out1, out2) in float32 (f32 Linear heads), shapes (N, C1), (N, C2).
    """
    n, c, h, w = x_nchw.shape
    assert c == 640 and h == 8 and w == 8, "two_head_wide expects (N, 640, 8, 8) features"
    hw = h * w
    c1 = w1.shape[0]
    c2 = w2.shape[0]

    # Lane-dense fused output width (multiple of 128) -> unmasked vector stores.
    out_pad = ((c1 + c2 + 127) // 128) * 128

    # Raw NCHW bytes with spatial flattened: (N, C, HW). Pure reshape -> no HBM transpose pass.
    feat = x_nchw.reshape(n, c, hw)

    # Fused, lane-padded head weight/bias; fold the avg-pool 1/HW factor into the weights.
    # (In a real deployment build these once, not per forward call.)
    w_fused = jnp.zeros((c, out_pad), jnp.float32)
    w_fused = w_fused.at[:, :c1].set(jnp.transpose(w1.astype(jnp.float32)) / float(hw))
    w_fused = w_fused.at[:, c1:c1 + c2].set(jnp.transpose(w2.astype(jnp.float32)) / float(hw))
    b_fused = jnp.zeros((1, out_pad), jnp.float32)
    b_fused = b_fused.at[0, :c1].set(b1.astype(jnp.float32))
    b_fused = b_fused.at[0, c1:c1 + c2].set(b2.astype(jnp.float32))

    tile_n = max(1, min(tile_n, n))
    grid = (pl.cdiv(n, tile_n),)

    # VMEM budget: double-buffered feature tiles (HW lane-padded to 128 for f32) + resident
    # fused weight/bias + output tiles, plus headroom. Raised above the 16/32 MiB default
    # scoped limits so v5e/v6e can also run larger tiles.
    itemsize = x_nchw.dtype.itemsize
    hw_padded = ((hw + 127) // 128) * 128
    vmem_limit_bytes = int(max(
        32 * 1024 * 1024,
        2 * tile_n * c * hw_padded * itemsize            # feature tiles (double-buffered)
        + 2 * (c + 1 + tile_n) * out_pad * 4             # weight + bias + output buffers
        + 4 * 1024 * 1024,                               # compiler scratch headroom
    ))

    out = pl.pallas_call(
        _fused_head_kernel,
        out_shape=jax.ShapeDtypeStruct((n, out_pad), jnp.float32),
        grid_spec=pltpu.PrefetchScalarGridSpec(
            num_scalar_prefetch=0,
            grid=grid,
            in_specs=[
                # Batch-tiled feature map: pipelined (prefetch i+1 while computing i).
                pl.BlockSpec((tile_n, c, hw), lambda i: (i, 0, 0)),
                # Fused weight/bias: constant index map -> DMA'd once, VMEM-resident.
                pl.BlockSpec((c, out_pad), lambda i: (0, 0)),
                pl.BlockSpec((1, out_pad), lambda i: (0, 0)),
            ],
            out_specs=pl.BlockSpec((tile_n, out_pad), lambda i: (i, 0)),
        ),
        compiler_params=pltpu.CompilerParams(
            dimension_semantics=("parallel",),            # v7x: shard batch tiles over 2 TCs
            vmem_limit_bytes=vmem_limit_bytes,
        ),
    )(feat, w_fused, b_fused)

    out1 = out[:, :c1]
    out2 = out[:, c1:c1 + c2]
    return out1, out2


def _reference(x_nchw, w1, b1, w2, b2):
    # Pure-JAX reference matching the PyTorch semantics.
    pooled = jnp.mean(x_nchw.astype(jnp.float32), axis=(2, 3))      # avg_pool2d(.,8).view(-1,640)
    o1 = pooled @ w1.astype(jnp.float32).T + b1.astype(jnp.float32)
    o2 = pooled @ w2.astype(jnp.float32).T + b2.astype(jnp.float32)
    return o1, o2


if __name__ == "__main__":
    key = jax.random.PRNGKey(0)
    k_x, k_w1, k_b1, k_w2, k_b2 = jax.random.split(key, 5)

    N, C, H, W = 2, 640, 8, 8      # backbone feature-map shape for WideResNet-28-10 on CIFAR
    C1, C2 = 10, 10                # two classification heads

    x = jax.random.normal(k_x, (N, C, H, W), dtype=jnp.float32)
    w1 = jax.random.normal(k_w1, (C1, C), dtype=jnp.float32) * 0.05
    b1 = jax.random.normal(k_b1, (C1,), dtype=jnp.float32) * 0.05
    w2 = jax.random.normal(k_w2, (C2, C), dtype=jnp.float32) * 0.05
    b2 = jax.random.normal(k_b2, (C2,), dtype=jnp.float32) * 0.05

    out1, out2 = two_head_wide_forward(x, w1, b1, w2, b2)
    out1 = jax.block_until_ready(out1)
    out2 = jax.block_until_ready(out2)

    ref1, ref2 = _reference(x, w1, b1, w2, b2)
    assert out1.shape == (N, C1) and out2.shape == (N, C2)
    assert out1.dtype == jnp.float32 and out2.dtype == jnp.float32
    assert jnp.allclose(out1, ref1, atol=1e-4, rtol=1e-4)
    assert jnp.allclose(out2, ref2, atol=1e-4, rtol=1e-4)

    print("KERNEL_OK")
</pallas_src>

<mosaic_0001>
module attributes {stable_mosaic.version = 11 : i64} {
  func.func @_fused_head_kernel(%arg0: i32, %arg1: memref<2x640x64xf32, #tpu.memory_space<vmem>>, %arg2: memref<640x128xf32, #tpu.memory_space<vmem>>, %arg3: memref<1x128xf32, #tpu.memory_space<vmem>>, %arg4: memref<2x128xf32, #tpu.memory_space<vmem>>) attributes {dimension_semantics = [#tpu.dimension_semantics<parallel>], iteration_bounds = array<i64: 1>, scalar_prefetch = 0 : i64, scratch_operands = 0 : i64, tpu.core_type = #tpu.core_type<tc>, window_params = [{transform_indices = @transform_0, window_bounds = array<i64: 2, 640, 64>}, {pipeline_mode = #tpu.pipeline_mode<synchronous>, transform_indices = @transform_1, window_bounds = array<i64: 640, 128>}, {pipeline_mode = #tpu.pipeline_mode<synchronous>, transform_indices = @transform_2, window_bounds = array<i64: 1, 128>}, {transform_indices = @transform_3, window_bounds = array<i64: 2, 128>}]} {
    %c0 = arith.constant 0 : index
    %c0_0 = arith.constant 0 : index
    %c0_1 = arith.constant 0 : index
    %0 = vector.load %arg1[%c0, %c0_0, %c0_1] : memref<2x640x64xf32, #tpu.memory_space<vmem>>, vector<2x640x64xf32>
    %cst = arith.constant dense<0.000000e+00> : vector<2x640xf32>
    %1 = vector.multi_reduction <add>, %0, %cst [2] : vector<2x640x64xf32> to vector<2x640xf32>
    %c0_2 = arith.constant 0 : index
    %c0_3 = arith.constant 0 : index
    %2 = vector.load %arg2[%c0_2, %c0_3] : memref<640x128xf32, #tpu.memory_space<vmem>>, vector<640x128xf32>
    %cst_4 = arith.constant dense<0.000000e+00> : vector<2x128xf32>
    %3 = tpu.matmul %1, %2, %cst_4 {dimension_numbers = #tpu.dot_dimension_numbers<[1], [0], [0], [1], [0, 0, 1, 1], [], []>} : vector<2x640xf32>, vector<640x128xf32>, vector<2x128xf32> -> vector<2x128xf32>
    %c0_5 = arith.constant 0 : index
    %c0_6 = arith.constant 0 : index
    %4 = vector.load %arg3[%c0_5, %c0_6] : memref<1x128xf32, #tpu.memory_space<vmem>>, vector<1x128xf32>
    %5 = vector.broadcast %4 : vector<1x128xf32> to vector<2x128xf32>
    %6 = arith.addf %3, %5 : vector<2x128xf32>
    %c0_7 = arith.constant 0 : index
    %c0_8 = arith.constant 0 : index
    %7 = vector.load %arg4[%c0_7, %c0_8] : memref<2x128xf32, #tpu.memory_space<vmem>>, vector<2x128xf32>
    tpu.vector_store %arg4[%c0_7, %c0_8], %6 {strides = array<i32>} : memref<2x128xf32, #tpu.memory_space<vmem>>, vector<2x128xf32>,
    return
  }
  func.func @transform_0(%arg0: i32) -> (i32, i32, i32) {
    %c0_i32 = arith.constant 0 : i32
    %c0_i32_0 = arith.constant 0 : i32
    %c0_i32_1 = arith.constant 0 : i32
    return %arg0, %c0_i32, %c0_i32_0 : i32, i32, i32
  }
  func.func @transform_1(%arg0: i32) -> (i32, i32) {
    %c0_i32 = arith.constant 0 : i32
    %c0_i32_0 = arith.constant 0 : i32
    %c0_i32_1 = arith.constant 0 : i32
    return %c0_i32, %c0_i32_0 : i32, i32
  }
  func.func @transform_2(%arg0: i32) -> (i32, i32) {
    %c0_i32 = arith.constant 0 : i32
    %c0_i32_0 = arith.constant 0 : i32
    %c0_i32_1 = arith.constant 0 : i32
    return %c0_i32, %c0_i32_0 : i32, i32
  }
  func.func @transform_3(%arg0: i32) -> (i32, i32) {
    %c0_i32 = arith.constant 0 : i32
    %c0_i32_0 = arith.constant 0 : i32
    return %arg0, %c0_i32 : i32, i32
  }
}

</mosaic_0001>

<llo_original>
// kernel: tpu_custom_call.1
$region0: #{tpu_custom_call.1}
  #allocation0 [shape = 'u32[]', space=smem, size = 0x4, offset = 0x4, fixed_abs, tag = 'smem constant byte address 0x4 - core index']
  #allocation1 [shape = 'u32[144,128]{1,0:T(1,128)}', space=vmem, size = 0x12000, scoped, tag = 'internal scratch']
  %s0 = inlined_call_operand.vmem [shape: f32[2,640,64], index: 0, kind: input, shape index: {}]
  %s1 = inlined_call_operand.vmem [shape: f32[640,128], index: 1, kind: input, shape index: {}]
  %s2 = inlined_call_operand.vmem [shape: f32[1,128], index: 2, kind: input, shape index: {}]
  %s3 = inlined_call_operand.hbm [shape: f32[2,128], index: 3, kind: output, shape index: {}]
  %s4 = sld [smem:[#allocation0]]
  $region22: #{tpu_custom_call.1} parent=0
    _
  %s6 = ssub.s32 1, %s4
  %s7 = scalar_select 0, %s6, %s4
  $region1: #{tpu_custom_call.1} parent=0
    #allocation2 [shape = 'u8[1024]{0}', space=vmem, size = 0x400, scoped, tag = 'output window, operand 0, single buffered']
    #allocation3 [shape = 's32[1]{0}', space=sflag, size = 0x4, scoped, tag = 'scoped memory for tpu_custom_call.1']
    %8 = vsyncpa [#allocation3], 0
    // Predicated region
    $region2: #{tpu_custom_call.1} parent=1 // pred_check
      _
    $region3: #{tpu_custom_call.1} parent=1 // pred_check_branch
      %10 = sbr.rel (0) target = $region5
    $region4: #{tpu_custom_call.1} parent=1 // pred_region
      _
    $region5: #{tpu_custom_call.1} parent=1 // pred_fallthru
      _
    // Predicated region
    $region6: #{tpu_custom_call.1} parent=1 // pred_check
      _
    $region7: #{tpu_custom_call.1} parent=1 // pred_check_branch
      %12 = sbr.rel (0) target = $region9
    $region8: #{tpu_custom_call.1} parent=1 // pred_region
      _
    $region9: #{tpu_custom_call.1} parent=1 // pred_fallthru
      _
    // Predicated region
    $region10: #{tpu_custom_call.1} parent=1 // pred_check
      _
    $region11: #{tpu_custom_call.1} parent=1 // pred_check_branch
      %14 = sbr.rel (0) target = $region13
    $region12: #{tpu_custom_call.1} parent=1 // pred_region
      _
    $region13: #{tpu_custom_call.1} parent=1 // pred_fallthru
      _
    %v15 = vld [vmem:[%s0] sm:$0xff]
    %v16 = vld [vmem:[%s0 + $0x8] sm:$0xff]
    %v17 = vld [vmem:[%s0 + $0x10] sm:$0xff]
    %v18 = vld [vmem:[%s0 + $0x18] sm:$0xff]
    %v19 = vld [vmem:[%s0 + $0x20] sm:$0xff]
    %v20 = vld [vmem:[%s0 + $0x28] sm:$0xff]
    %v21 = vld [vmem:[%s0 + $0x30] sm:$0xff]
    %v22 = vld [vmem:[%s0 + $0x38] sm:$0xff]
    %v23 = vld [vmem:[%s0 + $0x40] sm:$0xff]
    %v24 = vld [vmem:[%s0 + $0x48] sm:$0xff]
    %v25 = vld [vmem:[%s0 + $0x50] sm:$0xff]
    %v26 = vld [vmem:[%s0 + $0x58] sm:$0xff]
    %v27 = vld [vmem:[%s0 + $0x60] sm:$0xff]
    %v28 = vld [vmem:[%s0 + $0x68] sm:$0xff]
    %v29 = vld [vmem:[%s0 + $0x70] sm:$0xff]
    %v30 = vld [vmem:[%s0 + $0x78] sm:$0xff]
    %v31 = vld [vmem:[%s0 + $0x80] sm:$0xff]
    %v32 = vld [vmem:[%s0 + $0x88] sm:$0xff]
    %v33 = vld [vmem:[%s0 + $0x90] sm:$0xff]
    %v34 = vld [vmem:[%s0 + $0x98] sm:$0xff]
    %v35 = vld [vmem:[%s0 + $0xa0] sm:$0xff]
    %v36 = vld [vmem:[%s0 + $0xa8] sm:$0xff]
    %v37 = vld [vmem:[%s0 + $0xb0] sm:$0xff]
    %v38 = vld [vmem:[%s0 + $0xb8] sm:$0xff]
    %v39 = vld [vmem:[%s0 + $0xc0] sm:$0xff]
    %v40 = vld [vmem:[%s0 + $0xc8] sm:$0xff]
    %v41 = vld [vmem:[%s0 + $0xd0] sm:$0xff]
    %v42 = vld [vmem:[%s0 + $0xd8] sm:$0xff]
    %v43 = vld [vmem:[%s0 + $0xe0] sm:$0xff]
    %v44 = vld [vmem:[%s0 + $0xe8] sm:$0xff]
    %v45 = vld [vmem:[%s0 + $0xf0] sm:$0xff]
    %v46 = vld [vmem:[%s0 + $0xf8] sm:$0xff]
    %v47 = vld [vmem:[%s0 + $0x100] sm:$0xff]
    %v48 = vld [vmem:[%s0 + $0x108] sm:$0xff]
    %v49 = vld [vmem:[%s0 + $0x110] sm:$0xff]
    %v50 = vld [vmem:[%s0 + $0x118] sm:$0xff]
    %v51 = vld [vmem:[%s0 + $0x120] sm:$0xff]
    %v52 = vld [vmem:[%s0 + $0x128] sm:$0xff]
    %v53 = vld [vmem:[%s0 + $0x130] sm:$0xff]
    %v54 = vld [vmem:[%s0 + $0x138] sm:$0xff]
    %v55 = vld [vmem:[%s0 + $0x140] sm:$0xff]
    %v56 = vld [vmem:[%s0 + $0x148] sm:$0xff]
    %v57 = vld [vmem:[%s0 + $0x150] sm:$0xff]
    %v58 = vld [vmem:[%s0 + $0x158] sm:$0xff]
    %v59 = vld [vmem:[%s0 + $0x160] sm:$0xff]
    %v60 = vld [vmem:[%s0 + $0x168] sm:$0xff]
    %v61 = vld [vmem:[%s0 + $0x170] sm:$0xff]
    %v62 = vld [vmem:[%s0 + $0x178] sm:$0xff]
    %v63 = vld [vmem:[%s0 + $0x180] sm:$0xff]
    %v64 = vld [vmem:[%s0 + $0x188] sm:$0xff]
    %v65 = vld [vmem:[%s0 + $0x190] sm:$0xff]
    %v66 = vld [vmem:[%s0 + $0x198] sm:$0xff]
    %v67 = vld [vmem:[%s0 + $0x1a0] sm:$0xff]
    %v68 = vld [vmem:[%s0 + $0x1a8] sm:$0xff]
    %v69 = vld [vmem:[%s0 + $0x1b0] sm:$0xff]
    %v70 = vld [vmem:[%s0 + $0x1b8] sm:$0xff]
    %v71 = vld [vmem:[%s0 + $0x1c0] sm:$0xff]
    %v72 = vld [vmem:[%s0 + $0x1c8] sm:$0xff]
    %v73 = vld [vmem:[%s0 + $0x1d0] sm:$0xff]
    %v74 = vld [vmem:[%s0 + $0x1d8] sm:$0xff]
    %v75 = vld [vmem:[%s0 + $0x1e0] sm:$0xff]
    %v76 = vld [vmem:[%s0 + $0x1e8] sm:$0xff]
    %v77 = vld [vmem:[%s0 + $0x1f0] sm:$0xff]
    %v78 = vld [vmem:[%s0 + $0x1f8] sm:$0xff]
    %v79 = vld [vmem:[%s0 + $0x200] sm:$0xff]
    %v80 = vld [vmem:[%s0 + $0x208] sm:$0xff]
    %v81 = vld [vmem:[%s0 + $0x210] sm:$0xff]
    %v82 = vld [vmem:[%s0 + $0x218] sm:$0xff]
    %v83 = vld [vmem:[%s0 + $0x220] sm:$0xff]
    %v84 = vld [vmem:[%s0 + $0x228] sm:$0xff]
    %v85 = vld [vmem:[%s0 + $0x230] sm:$0xff]
    %v86 = vld [vmem:[%s0 + $0x238] sm:$0xff]
    %v87 = vld [vmem:[%s0 + $0x240] sm:$0xff]
    %v88 = vld [vmem:[%s0 + $0x248] sm:$0xff]
    %v89 = vld [vmem:[%s0 + $0x250] sm:$0xff]
    %v90 = vld [vmem:[%s0 + $0x258] sm:$0xff]
    %v91 = vld [vmem:[%s0 + $0x260] sm:$0xff]
    %v92 = vld [vmem:[%s0 + $0x268] sm:$0xff]
    %v93 = vld [vmem:[%s0 + $0x270] sm:$0xff]
    %v94 = vld [vmem:[%s0 + $0x278] sm:$0xff]
    %v95 = vld [vmem:[%s0 + $0x280] sm:$0xff]
    %v96 = vld [vmem:[%s0 + $0x288] sm:$0xff]
    %v97 = vld [vmem:[%s0 + $0x290] sm:$0xff]
    %v98 = vld [vmem:[%s0 + $0x298] sm:$0xff]
    %v99 = vld [vmem:[%s0 + $0x2a0] sm:$0xff]
    %v100 = vld [vmem:[%s0 + $0x2a8] sm:$0xff]
    %v101 = vld [vmem:[%s0 + $0x2b0] sm:$0xff]
    %v102 = vld [vmem:[%s0 + $0x2b8] sm:$0xff]
    %v103 = vld [vmem:[%s0 + $0x2c0] sm:$0xff]
    %v104 = vld [vmem:[%s0 + $0x2c8] sm:$0xff]
    %v105 = vld [vmem:[%s0 + $0x2d0] sm:$0xff]
    %v106 = vld [vmem:[%s0 + $0x2d8] sm:$0xff]
    %v107 = vld [vmem:[%s0 + $0x2e0] sm:$0xff]
    %v108 = vld [vmem:[%s0 + $0x2e8] sm:$0xff]
    %v109 = vld [vmem:[%s0 + $0x2f0] sm:$0xff]
    %v110 = vld [vmem:[%s0 + $0x2f8] sm:$0xff]
    %v111 = vld [vmem:[%s0 + $0x300] sm:$0xff]
    %v112 = vld [vmem:[%s0 + $0x308] sm:$0xff]
    %v113 = vld [vmem:[%s0 + $0x310] sm:$0xff]
    %v114 = vld [vmem:[%s0 + $0x318] sm:$0xff]
    %v115 = vld [vmem:[%s0 + $0x320] sm:$0xff]
    %v116 = vld [vmem:[%s0 + $0x328] sm:$0xff]
    %v117 = vld [vmem:[%s0 + $0x330] sm:$0xff]
    %v118 = vld [vmem:[%s0 + $0x338] sm:$0xff]
    %v119 = vld [vmem:[%s0 + $0x340] sm:$0xff]
    %v120 = vld [vmem:[%s0 + $0x348] sm:$0xff]
    %v121 = vld [vmem:[%s0 + $0x350] sm:$0xff]
    %v122 = vld [vmem:[%s0 + $0x358] sm:$0xff]
    %v123 = vld [vmem:[%s0 + $0x360] sm:$0xff]
    %v124 = vld [vmem:[%s0 + $0x368] sm:$0xff]
    %v125 = vld [vmem:[%s0 + $0x370] sm:$0xff]
    %v126 = vld [vmem:[%s0 + $0x378] sm:$0xff]
    %v127 = vld [vmem:[%s0 + $0x380] sm:$0xff]
    %v128 = vld [vmem:[%s0 + $0x388] sm:$0xff]
    %v129 = vld [vmem:[%s0 + $0x390] sm:$0xff]
    %v130 = vld [vmem:[%s0 + $0x398] sm:$0xff]
    %v131 = vld [vmem:[%s0 + $0x3a0] sm:$0xff]
    %v132 = vld [vmem:[%s0 + $0x3a8] sm:$0xff]
    %v133 = vld [vmem:[%s0 + $0x3b0] sm:$0xff]
    %v134 = vld [vmem:[%s0 + $0x3b8] sm:$0xff]
    %v135 = vld [vmem:[%s0 + $0x3c0] sm:$0xff]
    %v136 = vld [vmem:[%s0 + $0x3c8] sm:$0xff]
    %v137 = vld [vmem:[%s0 + $0x3d0] sm:$0xff]
    %v138 = vld [vmem:[%s0 + $0x3d8] sm:$0xff]
    %v139 = vld [vmem:[%s0 + $0x3e0] sm:$0xff]
    %v140 = vld [vmem:[%s0 + $0x3e8] sm:$0xff]
    %v141 = vld [vmem:[%s0 + $0x3f0] sm:$0xff]
    %v142 = vld [vmem:[%s0 + $0x3f8] sm:$0xff]
    %v143 = vld [vmem:[%s0 + $0x400] sm:$0xff]
    %v144 = vld [vmem:[%s0 + $0x408] sm:$0xff]
    %v145 = vld [vmem:[%s0 + $0x410] sm:$0xff]
    %v146 = vld [vmem:[%s0 + $0x418] sm:$0xff]
    %v147 = vld [vmem:[%s0 + $0x420] sm:$0xff]
    %v148 = vld [vmem:[%s0 + $0x428] sm:$0xff]
    %v149 = vld [vmem:[%s0 + $0x430] sm:$0xff]
    %v150 = vld [vmem:[%s0 + $0x438] sm:$0xff]
    %v151 = vld [vmem:[%s0 + $0x440] sm:$0xff]
    %v152 = vld [vmem:[%s0 + $0x448] sm:$0xff]
    %v153 = vld [vmem:[%s0 + $0x450] sm:$0xff]
    %v154 = vld [vmem:[%s0 + $0x458] sm:$0xff]
    %v155 = vld [vmem:[%s0 + $0x460] sm:$0xff]
    %v156 = vld [vmem:[%s0 + $0x468] sm:$0xff]
    %v157 = vld [vmem:[%s0 + $0x470] sm:$0xff]
    %v158 = vld [vmem:[%s0 + $0x478] sm:$0xff]
    %v159 = vld [vmem:[%s0 + $0x480] sm:$0xff]
    %v160 = vld [vmem:[%s0 + $0x488] sm:$0xff]
    %v161 = vld [vmem:[%s0 + $0x490] sm:$0xff]
    %v162 = vld [vmem:[%s0 + $0x498] sm:$0xff]
    %v163 = vld [vmem:[%s0 + $0x4a0] sm:$0xff]
    %v164 = vld [vmem:[%s0 + $0x4a8] sm:$0xff]
    %v165 = vld [vmem:[%s0 + $0x4b0] sm:$0xff]
    %v166 = vld [vmem:[%s0 + $0x4b8] sm:$0xff]
    %v167 = vld [vmem:[%s0 + $0x4c0] sm:$0xff]
    %v168 = vld [vmem:[%s0 + $0x4c8] sm:$0xff]
    %v169 = vld [vmem:[%s0 + $0x4d0] sm:$0xff]
    %v170 = vld [vmem:[%s0 + $0x4d8] sm:$0xff]
    %v171 = vld [vmem:[%s0 + $0x4e0] sm:$0xff]
    %v172 = vld [vmem:[%s0 + $0x4e8] sm:$0xff]
    %v173 = vld [vmem:[%s0 + $0x4f0] sm:$0xff]
    %v174 = vld [vmem:[%s0 + $0x4f8] sm:$0xff]
    %vm175 = vcmask 523264
    %v176 = vsel %vm175, %v15, 0.0
    %177 = vadd.xlane.f32.xlu0 %v176
    %v178 = vpop.xlane.xlu0 %177
    %v179 = vsel %vm175, %v16, 0.0
    %180 = vadd.xlane.f32.xlu0 %v179
    %v181 = vpop.xlane.xlu0 %180
    %v182 = vsel %vm175, %v17, 0.0
    %183 = vadd.xlane.f32.xlu0 %v182
    %v184 = vpop.xlane.xlu0 %183
    %v185 = vsel %vm175, %v18, 0.0
    %186 = vadd.xlane.f32.xlu0 %v185
    %v187 = vpop.xlane.xlu0 %186
    %v188 = vsel %vm175, %v19, 0.0
    %189 = vadd.xlane.f32.xlu0 %v188
    %v190 = vpop.xlane.xlu0 %189
    %v191 = vsel %vm175, %v20, 0.0
    %192 = vadd.xlane.f32.xlu0 %v191
    %v193 = vpop.xlane.xlu0 %192
    %v194 = vsel %vm175, %v21, 0.0
    %195 = vadd.xlane.f32.xlu0 %v194
    %v196 = vpop.xlane.xlu0 %195
    %v197 = vsel %vm175, %v22, 0.0
    %198 = vadd.xlane.f32.xlu0 %v197
    %v199 = vpop.xlane.xlu0 %198
    %v200 = vsel %vm175, %v23, 0.0
    %201 = vadd.xlane.f32.xlu0 %v200
    %v202 = vpop.xlane.xlu0 %201
    %v203 = vsel %vm175, %v24, 0.0
    %204 = vadd.xlane.f32.xlu0 %v203
    %v205 = vpop.xlane.xlu0 %204
    %v206 = vsel %vm175, %v25, 0.0
    %207 = vadd.xlane.f32.xlu0 %v206
    %v208 = vpop.xlane.xlu0 %207
    %v209 = vsel %vm175, %v26, 0.0
    %210 = vadd.xlane.f32.xlu0 %v209
    %v211 = vpop.xlane.xlu0 %210
    %v212 = vsel %vm175, %v27, 0.0
    %213 = vadd.xlane.f32.xlu0 %v212
    %v214 = vpop.xlane.xlu0 %213
    %v215 = vsel %vm175, %v28, 0.0
    %216 = vadd.xlane.f32.xlu0 %v215
    %v217 = vpop.xlane.xlu0 %216
    %v218 = vsel %vm175, %v29, 0.0
    %219 = vadd.xlane.f32.xlu0 %v218
    %v220 = vpop.xlane.xlu0 %219
    %v221 = vsel %vm175, %v30, 0.0
    %222 = vadd.xlane.f32.xlu0 %v221
    %v223 = vpop.xlane.xlu0 %222
    %v224 = vsel %vm175, %v31, 0.0
    %225 = vadd.xlane.f32.xlu0 %v224
    %v226 = vpop.xlane.xlu0 %225
    %v227 = vsel %vm175, %v32, 0.0
    %228 = vadd.xlane.f32.xlu0 %v227
    %v229 = vpop.xlane.xlu0 %228
    %v230 = vsel %vm175, %v33, 0.0
    %231 = vadd.xlane.f32.xlu0 %v230
    %v232 = vpop.xlane.xlu0 %231
    %v233 = vsel %vm175, %v34, 0.0
    %234 = vadd.xlane.f32.xlu0 %v233
    %v235 = vpop.xlane.xlu0 %234
    %v236 = vsel %vm175, %v35, 0.0
    %237 = vadd.xlane.f32.xlu0 %v236
    %v238 = vpop.xlane.xlu0 %237
    %v239 = vsel %vm175, %v36, 0.0
    %240 = vadd.xlane.f32.xlu0 %v239
    %v241 = vpop.xlane.xlu0 %240
    %v242 = vsel %vm175, %v37, 0.0
    %243 = vadd.xlane.f32.xlu0 %v242
    %v244 = vpop.xlane.xlu0 %243
    %v245 = vsel %vm175, %v38, 0.0
    %246 = vadd.xlane.f32.xlu0 %v245
    %v247 = vpop.xlane.xlu0 %246
    %v248 = vsel %vm175, %v39, 0.0
    %249 = vadd.xlane.f32.xlu0 %v248
    %v250 = vpop.xlane.xlu0 %249
    %v251 = vsel %vm175, %v40, 0.0
    %252 = vadd.xlane.f32.xlu0 %v251
    %v253 = vpop.xlane.xlu0 %252
    %v254 = vsel %vm175, %v41, 0.0
    %255 = vadd.xlane.f32.xlu0 %v254
    %v256 = vpop.xlane.xlu0 %255
    %v257 = vsel %vm175, %v42, 0.0
    %258 = vadd.xlane.f32.xlu0 %v257
    %v259 = vpop.xlane.xlu0 %258
    %v260 = vsel %vm175, %v43, 0.0
    %261 = vadd.xlane.f32.xlu0 %v260
    %v262 = vpop.xlane.xlu0 %261
    %v263 = vsel %vm175, %v44, 0.0
    %264 = vadd.xlane.f32.xlu0 %v263
    %v265 = vpop.xlane.xlu0 %264
    %v266 = vsel %vm175, %v45, 0.0
    %267 = vadd.xlane.f32.xlu0 %v266
    %v268 = vpop.xlane.xlu0 %267
    %v269 = vsel %vm175, %v46, 0.0
    %270 = vadd.xlane.f32.xlu0 %v269
    %v271 = vpop.xlane.xlu0 %270
    %v272 = vsel %vm175, %v47, 0.0
    %273 = vadd.xlane.f32.xlu0 %v272
    %v274 = vpop.xlane.xlu0 %273
    %v275 = vsel %vm175, %v48, 0.0
    %276 = vadd.xlane.f32.xlu0 %v275
    %v277 = vpop.xlane.xlu0 %276
    %v278 = vsel %vm175, %v49, 0.0
    %279 = vadd.xlane.f32.xlu0 %v278
    %v280 = vpop.xlane.xlu0 %279
    %v281 = vsel %vm175, %v50, 0.0
    %282 = vadd.xlane.f32.xlu0 %v281
    %v283 = vpop.xlane.xlu0 %282
    %v284 = vsel %vm175, %v51, 0.0
    %285 = vadd.xlane.f32.xlu0 %v284
    %v286 = vpop.xlane.xlu0 %285
    %v287 = vsel %vm175, %v52, 0.0
    %288 = vadd.xlane.f32.xlu0 %v287
    %v289 = vpop.xlane.xlu0 %288
    %v290 = vsel %vm175, %v53, 0.0
    %291 = vadd.xlane.f32.xlu0 %v290
    %v292 = vpop.xlane.xlu0 %291
    %v293 = vsel %vm175, %v54, 0.0
    %294 = vadd.xlane.f32.xlu0 %v293
    %v295 = vpop.xlane.xlu0 %294
    %v296 = vsel %vm175, %v55, 0.0
    %297 = vadd.xlane.f32.xlu0 %v296
    %v298 = vpop.xlane.xlu0 %297
    %v299 = vsel %vm175, %v56, 0.0
    %300 = vadd.xlane.f32.xlu0 %v299
    %v301 = vpop.xlane.xlu0 %300
    %v302 = vsel %vm175, %v57, 0.0
    %303 = vadd.xlane.f32.xlu0 %v302
    %v304 = vpop.xlane.xlu0 %303
    %v305 = vsel %vm175, %v58, 0.0
    %306 = vadd.xlane.f32.xlu0 %v305
    %v307 = vpop.xlane.xlu0 %306
    %v308 = vsel %vm175, %v59, 0.0
    %309 = vadd.xlane.f32.xlu0 %v308
    %v310 = vpop.xlane.xlu0 %309
    %v311 = vsel %vm175, %v60, 0.0
    %312 = vadd.xlane.f32.xlu0 %v311
    %v313 = vpop.xlane.xlu0 %312
    %v314 = vsel %vm175, %v61, 0.0
    %315 = vadd.xlane.f32.xlu0 %v314
    %v316 = vpop.xlane.xlu0 %315
    %v317 = vsel %vm175, %v62, 0.0
    %318 = vadd.xlane.f32.xlu0 %v317
    %v319 = vpop.xlane.xlu0 %318
    %v320 = vsel %vm175, %v63, 0.0
    %321 = vadd.xlane.f32.xlu0 %v320
    %v322 = vpop.xlane.xlu0 %321
    %v323 = vsel %vm175, %v64, 0.0
    %324 = vadd.xlane.f32.xlu0 %v323
    %v325 = vpop.xlane.xlu0 %324
    %v326 = vsel %vm175, %v65, 0.0
    %327 = vadd.xlane.f32.xlu0 %v326
    %v328 = vpop.xlane.xlu0 %327
    %v329 = vsel %vm175, %v66, 0.0
    %330 = vadd.xlane.f32.xlu0 %v329
    %v331 = vpop.xlane.xlu0 %330
    %v332 = vsel %vm175, %v67, 0.0
    %333 = vadd.xlane.f32.xlu0 %v332
    %v334 = vpop.xlane.xlu0 %333
    %v335 = vsel %vm175, %v68, 0.0
    %336 = vadd.xlane.f32.xlu0 %v335
    %v337 = vpop.xlane.xlu0 %336
    %v338 = vsel %vm175, %v69, 0.0
    %339 = vadd.xlane.f32.xlu0 %v338
    %v340 = vpop.xlane.xlu0 %339
    %v341 = vsel %vm175, %v70, 0.0
    %342 = vadd.xlane.f32.xlu0 %v341
    %v343 = vpop.xlane.xlu0 %342
    %v344 = vsel %vm175, %v71, 0.0
    %345 = vadd.xlane.f32.xlu0 %v344
    %v346 = vpop.xlane.xlu0 %345
    %v347 = vsel %vm175, %v72, 0.0
    %348 = vadd.xlane.f32.xlu0 %v347
    %v349 = vpop.xlane.xlu0 %348
    %v350 = vsel %vm175, %v73, 0.0
    %351 = vadd.xlane.f32.xlu0 %v350
    %v352 = vpop.xlane.xlu0 %351
    %v353 = vsel %vm175, %v74, 0.0
    %354 = vadd.xlane.f32.xlu0 %v353
    %v355 = vpop.xlane.xlu0 %354
    %v356 = vsel %vm175, %v75, 0.0
    %357 = vadd.xlane.f32.xlu0 %v356
    %v358 = vpop.xlane.xlu0 %357
    %v359 = vsel %vm175, %v76, 0.0
    %360 = vadd.xlane.f32.xlu0 %v359
    %v361 = vpop.xlane.xlu0 %360
    %v362 = vsel %vm175, %v77, 0.0
    %363 = vadd.xlane.f32.xlu0 %v362
    %v364 = vpop.xlane.xlu0 %363
    %v365 = vsel %vm175, %v78, 0.0
    %366 = vadd.xlane.f32.xlu0 %v365
    %v367 = vpop.xlane.xlu0 %366
    %v368 = vsel %vm175, %v79, 0.0
    %369 = vadd.xlane.f32.xlu0 %v368
    %v370 = vpop.xlane.xlu0 %369
    %v371 = vsel %vm175, %v80, 0.0
    %372 = vadd.xlane.f32.xlu0 %v371
    %v373 = vpop.xlane.xlu0 %372
    %v374 = vsel %vm175, %v81, 0.0
    %375 = vadd.xlane.f32.xlu0 %v374
    %v376 = vpop.xlane.xlu0 %375
    %v377 = vsel %vm175, %v82, 0.0
    %378 = vadd.xlane.f32.xlu0 %v377
    %v379 = vpop.xlane.xlu0 %378
    %v380 = vsel %vm175, %v83, 0.0
    %381 = vadd.xlane.f32.xlu0 %v380
    %v382 = vpop.xlane.xlu0 %381
    %v383 = vsel %vm175, %v84, 0.0
    %384 = vadd.xlane.f32.xlu0 %v383
    %v385 = vpop.xlane.xlu0 %384
    %v386 = vsel %vm175, %v85, 0.0
    %387 = vadd.xlane.f32.xlu0 %v386
    %v388 = vpop.xlane.xlu0 %387
    %v389 = vsel %vm175, %v86, 0.0
    %390 = vadd.xlane.f32.xlu0 %v389
    %v391 = vpop.xlane.xlu0 %390
    %v392 = vsel %vm175, %v87, 0.0
    %393 = vadd.xlane.f32.xlu0 %v392
    %v394 = vpop.xlane.xlu0 %393
    %v395 = vsel %vm175, %v88, 0.0
    %396 = vadd.xlane.f32.xlu0 %v395
    %v397 = vpop.xlane.xlu0 %396
    %v398 = vsel %vm175, %v89, 0.0
    %399 = vadd.xlane.f32.xlu0 %v398
    %v400 = vpop.xlane.xlu0 %399
    %v401 = vsel %vm175, %v90, 0.0
    %402 = vadd.xlane.f32.xlu0 %v401
    %v403 = vpop.xlane.xlu0 %402
    %v404 = vsel %vm175, %v91, 0.0
    %405 = vadd.xlane.f32.xlu0 %v404
    %v406 = vpop.xlane.xlu0 %405
    %v407 = vsel %vm175, %v92, 0.0
    %408 = vadd.xlane.f32.xlu0 %v407
    %v409 = vpop.xlane.xlu0 %408
    %v410 = vsel %vm175, %v93, 0.0
    %411 = vadd.xlane.f32.xlu0 %v410
    %v412 = vpop.xlane.xlu0 %411
    %v413 = vsel %vm175, %v94, 0.0
    %414 = vadd.xlane.f32.xlu0 %v413
    %v415 = vpop.xlane.xlu0 %414
    %v416 = vsel %vm175, %v95, 0.0
    %417 = vadd.xlane.f32.xlu0 %v416
    %v418 = vpop.xlane.xlu0 %417
    %v419 = vsel %vm175, %v96, 0.0
    %420 = vadd.xlane.f32.xlu0 %v419
    %v421 = vpop.xlane.xlu0 %420
    %v422 = vsel %vm175, %v97, 0.0
    %423 = vadd.xlane.f32.xlu0 %v422
    %v424 = vpop.xlane.xlu0 %423
    %v425 = vsel %vm175, %v98, 0.0
    %426 = vadd.xlane.f32.xlu0 %v425
    %v427 = vpop.xlane.xlu0 %426
    %v428 = vsel %vm175, %v99, 0.0
    %429 = vadd.xlane.f32.xlu0 %v428
    %v430 = vpop.xlane.xlu0 %429
    %v431 = vsel %vm175, %v100, 0.0
    %432 = vadd.xlane.f32.xlu0 %v431
    %v433 = vpop.xlane.xlu0 %432
    %v434 = vsel %vm175, %v101, 0.0
    %435 = vadd.xlane.f32.xlu0 %v434
    %v436 = vpop.xlane.xlu0 %435
    %v437 = vsel %vm175, %v102, 0.0
    %438 = vadd.xlane.f32.xlu0 %v437
    %v439 = vpop.xlane.xlu0 %438
    %v440 = vsel %vm175, %v103, 0.0
    %441 = vadd.xlane.f32.xlu0 %v440
    %v442 = vpop.xlane.xlu0 %441
    %v443 = vsel %vm175, %v104, 0.0
    %444 = vadd.xlane.f32.xlu0 %v443
    %v445 = vpop.xlane.xlu0 %444
    %v446 = vsel %vm175, %v105, 0.0
    %447 = vadd.xlane.f32.xlu0 %v446
    %v448 = vpop.xlane.xlu0 %447
    %v449 = vsel %vm175, %v106, 0.0
    %450 = vadd.xlane.f32.xlu0 %v449
    %v451 = vpop.xlane.xlu0 %450
    %v452 = vsel %vm175, %v107, 0.0
    %453 = vadd.xlane.f32.xlu0 %v452
    %v454 = vpop.xlane.xlu0 %453
    %v455 = vsel %vm175, %v108, 0.0
    %456 = vadd.xlane.f32.xlu0 %v455
    %v457 = vpop.xlane.xlu0 %456
    %v458 = vsel %vm175, %v109, 0.0
    %459 = vadd.xlane.f32.xlu0 %v458
    %v460 = vpop.xlane.xlu0 %459
    %v461 = vsel %vm175, %v110, 0.0
    %462 = vadd.xlane.f32.xlu0 %v461
    %v463 = vpop.xlane.xlu0 %462
    %v464 = vsel %vm175, %v111, 0.0
    %465 = vadd.xlane.f32.xlu0 %v464
    %v466 = vpop.xlane.xlu0 %465
    %v467 = vsel %vm175, %v112, 0.0
    %468 = vadd.xlane.f32.xlu0 %v467
    %v469 = vpop.xlane.xlu0 %468
    %v470 = vsel %vm175, %v113, 0.0
    %471 = vadd.xlane.f32.xlu0 %v470
    %v472 = vpop.xlane.xlu0 %471
    %v473 = vsel %vm175, %v114, 0.0
    %474 = vadd.xlane.f32.xlu0 %v473
    %v475 = vpop.xlane.xlu0 %474
    %v476 = vsel %vm175, %v115, 0.0
    %477 = vadd.xlane.f32.xlu0 %v476
    %v478 = vpop.xlane.xlu0 %477
    %v479 = vsel %vm175, %v116, 0.0
    %480 = vadd.xlane.f32.xlu0 %v479
    %v481 = vpop.xlane.xlu0 %480
    %v482 = vsel %vm175, %v117, 0.0
    %483 = vadd.xlane.f32.xlu0 %v482
    %v484 = vpop.xlane.xlu0 %483
    %v485 = vsel %vm175, %v118, 0.0
    %486 = vadd.xlane.f32.xlu0 %v485
    %v487 = vpop.xlane.xlu0 %486
    %v488 = vsel %vm175, %v119, 0.0
    %489 = vadd.xlane.f32.xlu0 %v488
    %v490 = vpop.xlane.xlu0 %489
    %v491 = vsel %vm175, %v120, 0.0
    %492 = vadd.xlane.f32.xlu0 %v491
    %v493 = vpop.xlane.xlu0 %492
    %v494 = vsel %vm175, %v121, 0.0
    %495 = vadd.xlane.f32.xlu0 %v494
    %v496 = vpop.xlane.xlu0 %495
    %v497 = vsel %vm175, %v122, 0.0
    %498 = vadd.xlane.f32.xlu0 %v497
    %v499 = vpop.xlane.xlu0 %498
    %v500 = vsel %vm175, %v123, 0.0
    %501 = vadd.xlane.f32.xlu0 %v500
    %v502 = vpop.xlane.xlu0 %501
    %v503 = vsel %vm175, %v124, 0.0
    %504 = vadd.xlane.f32.xlu0 %v503
    %v505 = vpop.xlane.xlu0 %504
    %v506 = vsel %vm175, %v125, 0.0
    %507 = vadd.xlane.f32.xlu0 %v506
    %v508 = vpop.xlane.xlu0 %507
    %v509 = vsel %vm175, %v126, 0.0
    %510 = vadd.xlane.f32.xlu0 %v509
    %v511 = vpop.xlane.xlu0 %510
    %v512 = vsel %vm175, %v127, 0.0
    %513 = vadd.xlane.f32.xlu0 %v512
    %v514 = vpop.xlane.xlu0 %513
    %v515 = vsel %vm175, %v128, 0.0
    %516 = vadd.xlane.f32.xlu0 %v515
    %v517 = vpop.xlane.xlu0 %516
    %v518 = vsel %vm175, %v129, 0.0
    %519 = vadd.xlane.f32.xlu0 %v518
    %v520 = vpop.xlane.xlu0 %519
    %v521 = vsel %vm175, %v130, 0.0
    %522 = vadd.xlane.f32.xlu0 %v521
    %v523 = vpop.xlane.xlu0 %522
    %v524 = vsel %vm175, %v131, 0.0
    %525 = vadd.xlane.f32.xlu0 %v524
    %v526 = vpop.xlane.xlu0 %525
    %v527 = vsel %vm175, %v132, 0.0
    %528 = vadd.xlane.f32.xlu0 %v527
    %v529 = vpop.xlane.xlu0 %528
    %v530 = vsel %vm175, %v133, 0.0
    %531 = vadd.xlane.f32.xlu0 %v530
    %v532 = vpop.xlane.xlu0 %531
    %v533 = vsel %vm175, %v134, 0.0
    %534 = vadd.xlane.f32.xlu0 %v533
    %v535 = vpop.xlane.xlu0 %534
    %v536 = vsel %vm175, %v135, 0.0
    %537 = vadd.xlane.f32.xlu0 %v536
    %v538 = vpop.xlane.xlu0 %537
    %v539 = vsel %vm175, %v136, 0.0
    %540 = vadd.xlane.f32.xlu0 %v539
    %v541 = vpop.xlane.xlu0 %540
    %v542 = vsel %vm175, %v137, 0.0
    %543 = vadd.xlane.f32.xlu0 %v542
    %v544 = vpop.xlane.xlu0 %543
    %v545 = vsel %vm175, %v138, 0.0
    %546 = vadd.xlane.f32.xlu0 %v545
    %v547 = vpop.xlane.xlu0 %546
    %v548 = vsel %vm175, %v139, 0.0
    %549 = vadd.xlane.f32.xlu0 %v548
    %v550 = vpop.xlane.xlu0 %549
    %v551 = vsel %vm175, %v140, 0.0
    %552 = vadd.xlane.f32.xlu0 %v551
    %v553 = vpop.xlane.xlu0 %552
    %v554 = vsel %vm175, %v141, 0.0
    %555 = vadd.xlane.f32.xlu0 %v554
    %v556 = vpop.xlane.xlu0 %555
    %v557 = vsel %vm175, %v142, 0.0
    %558 = vadd.xlane.f32.xlu0 %v557
    %v559 = vpop.xlane.xlu0 %558
    %v560 = vsel %vm175, %v143, 0.0
    %561 = vadd.xlane.f32.xlu0 %v560
    %v562 = vpop.xlane.xlu0 %561
    %v563 = vsel %vm175, %v144, 0.0
    %564 = vadd.xlane.f32.xlu0 %v563
    %v565 = vpop.xlane.xlu0 %564
    %v566 = vsel %vm175, %v145, 0.0
    %567 = vadd.xlane.f32.xlu0 %v566
    %v568 = vpop.xlane.xlu0 %567
    %v569 = vsel %vm175, %v146, 0.0
    %570 = vadd.xlane.f32.xlu0 %v569
    %v571 = vpop.xlane.xlu0 %570
    %v572 = vsel %vm175, %v147, 0.0
    %573 = vadd.xlane.f32.xlu0 %v572
    %v574 = vpop.xlane.xlu0 %573
    %v575 = vsel %vm175, %v148, 0.0
    %576 = vadd.xlane.f32.xlu0 %v575
    %v577 = vpop.xlane.xlu0 %576
    %v578 = vsel %vm175, %v149, 0.0
    %579 = vadd.xlane.f32.xlu0 %v578
    %v580 = vpop.xlane.xlu0 %579
    %v581 = vsel %vm175, %v150, 0.0
    %582 = vadd.xlane.f32.xlu0 %v581
    %v583 = vpop.xlane.xlu0 %582
    %v584 = vsel %vm175, %v151, 0.0
    %585 = vadd.xlane.f32.xlu0 %v584
    %v586 = vpop.xlane.xlu0 %585
    %v587 = vsel %vm175, %v152, 0.0
    %588 = vadd.xlane.f32.xlu0 %v587
    %v589 = vpop.xlane.xlu0 %588
    %v590 = vsel %vm175, %v153, 0.0
    %591 = vadd.xlane.f32.xlu0 %v590
    %v592 = vpop.xlane.xlu0 %591
    %v593 = vsel %vm175, %v154, 0.0
    %594 = vadd.xlane.f32.xlu0 %v593
    %v595 = vpop.xlane.xlu0 %594
    %v596 = vsel %vm175, %v155, 0.0
    %597 = vadd.xlane.f32.xlu0 %v596
    %v598 = vpop.xlane.xlu0 %597
    %v599 = vsel %vm175, %v156, 0.0
    %600 = vadd.xlane.f32.xlu0 %v599
    %v601 = vpop.xlane.xlu0 %600
    %v602 = vsel %vm175, %v157, 0.0
    %603 = vadd.xlane.f32.xlu0 %v602
    %v604 = vpop.xlane.xlu0 %603
    %v605 = vsel %vm175, %v158, 0.0
    %606 = vadd.xlane.f32.xlu0 %v605
    %v607 = vpop.xlane.xlu0 %606
    %v608 = vsel %vm175, %v159, 0.0
    %609 = vadd.xlane.f32.xlu0 %v608
    %v610 = vpop.xlane.xlu0 %609
    %v611 = vsel %vm175, %v160, 0.0
    %612 = vadd.xlane.f32.xlu0 %v611
    %v613 = vpop.xlane.xlu0 %612
    %v614 = vsel %vm175, %v161, 0.0
    %615 = vadd.xlane.f32.xlu0 %v614
    %v616 = vpop.xlane.xlu0 %615
    %v617 = vsel %vm175, %v162, 0.0
    %618 = vadd.xlane.f32.xlu0 %v617
    %v619 = vpop.xlane.xlu0 %618
    %v620 = vsel %vm175, %v163, 0.0
    %621 = vadd.xlane.f32.xlu0 %v620
    %v622 = vpop.xlane.xlu0 %621
    %v623 = vsel %vm175, %v164, 0.0
    %624 = vadd.xlane.f32.xlu0 %v623
    %v625 = vpop.xlane.xlu0 %624
    %v626 = vsel %vm175, %v165, 0.0
    %627 = vadd.xlane.f32.xlu0 %v626
    %v628 = vpop.xlane.xlu0 %627
    %v629 = vsel %vm175, %v166, 0.0
    %630 = vadd.xlane.f32.xlu0 %v629
    %v631 = vpop.xlane.xlu0 %630
    %v632 = vsel %vm175, %v167, 0.0
    %633 = vadd.xlane.f32.xlu0 %v632
    %v634 = vpop.xlane.xlu0 %633
    %v635 = vsel %vm175, %v168, 0.0
    %636 = vadd.xlane.f32.xlu0 %v635
    %v637 = vpop.xlane.xlu0 %636
    %v638 = vsel %vm175, %v169, 0.0
    %639 = vadd.xlane.f32.xlu0 %v638
    %v640 = vpop.xlane.xlu0 %639
    %v641 = vsel %vm175, %v170, 0.0
    %642 = vadd.xlane.f32.xlu0 %v641
    %v643 = vpop.xlane.xlu0 %642
    %v644 = vsel %vm175, %v171, 0.0
    %645 = vadd.xlane.f32.xlu0 %v644
    %v646 = vpop.xlane.xlu0 %645
    %v647 = vsel %vm175, %v172, 0.0
    %648 = vadd.xlane.f32.xlu0 %v647
    %v649 = vpop.xlane.xlu0 %648
    %v650 = vsel %vm175, %v173, 0.0
    %651 = vadd.xlane.f32.xlu0 %v650
    %v652 = vpop.xlane.xlu0 %651
    %v653 = vsel %vm175, %v174, 0.0
    %654 = vadd.xlane.f32.xlu0 %v653
    %v655 = vpop.xlane.xlu0 %654
    %v656 = vld [vmem:[%s1] sm:$0xff]
    %v657 = vld [vmem:[%s1 + $0x8] sm:$0xff]
    %v658 = vld [vmem:[%s1 + $0x10] sm:$0xff]
    %v659 = vld [vmem:[%s1 + $0x18] sm:$0xff]
    %v660 = vld [vmem:[%s1 + $0x20] sm:$0xff]
    %v661 = vld [vmem:[%s1 + $0x28] sm:$0xff]
    %v662 = vld [vmem:[%s1 + $0x30] sm:$0xff]
    %v663 = vld [vmem:[%s1 + $0x38] sm:$0xff]
    %v664 = vld [vmem:[%s1 + $0x40] sm:$0xff]
    %v665 = vld [vmem:[%s1 + $0x48] sm:$0xff]
    %v666 = vld [vmem:[%s1 + $0x50] sm:$0xff]
    %v667 = vld [vmem:[%s1 + $0x58] sm:$0xff]
    %v668 = vld [vmem:[%s1 + $0x60] sm:$0xff]
    %v669 = vld [vmem:[%s1 + $0x68] sm:$0xff]
    %v670 = vld [vmem:[%s1 + $0x70] sm:$0xff]
    %v671 = vld [vmem:[%s1 + $0x78] sm:$0xff]
    %v672 = vld [vmem:[%s1 + $0x80] sm:$0xff]
    %v673 = vld [vmem:[%s1 + $0x88] sm:$0xff]
    %v674 = vld [vmem:[%s1 + $0x90] sm:$0xff]
    %v675 = vld [vmem:[%s1 + $0x98] sm:$0xff]
    %v676 = vld [vmem:[%s1 + $0xa0] sm:$0xff]
    %v677 = vld [vmem:[%s1 + $0xa8] sm:$0xff]
    %v678 = vld [vmem:[%s1 + $0xb0] sm:$0xff]
    %v679 = vld [vmem:[%s1 + $0xb8] sm:$0xff]
    %v680 = vld [vmem:[%s1 + $0xc0] sm:$0xff]
    %v681 = vld [vmem:[%s1 + $0xc8] sm:$0xff]
    %v682 = vld [vmem:[%s1 + $0xd0] sm:$0xff]
    %v683 = vld [vmem:[%s1 + $0xd8] sm:$0xff]
    %v684 = vld [vmem:[%s1 + $0xe0] sm:$0xff]
    %v685 = vld [vmem:[%s1 + $0xe8] sm:$0xff]
    %v686 = vld [vmem:[%s1 + $0xf0] sm:$0xff]
    %v687 = vld [vmem:[%s1 + $0xf8] sm:$0xff]
    %v688 = vld [vmem:[%s1 + $0x100] sm:$0xff]
    %v689 = vld [vmem:[%s1 + $0x108] sm:$0xff]
    %v690 = vld [vmem:[%s1 + $0x110] sm:$0xff]
    %v691 = vld [vmem:[%s1 + $0x118] sm:$0xff]
    %v692 = vld [vmem:[%s1 + $0x120] sm:$0xff]
    %v693 = vld [vmem:[%s1 + $0x128] sm:$0xff]
    %v694 = vld [vmem:[%s1 + $0x130] sm:$0xff]
    %v695 = vld [vmem:[%s1 + $0x138] sm:$0xff]
    %v696 = vld [vmem:[%s1 + $0x140] sm:$0xff]
    %v697 = vld [vmem:[%s1 + $0x148] sm:$0xff]
    %v698 = vld [vmem:[%s1 + $0x150] sm:$0xff]
    %v699 = vld [vmem:[%s1 + $0x158] sm:$0xff]
    %v700 = vld [vmem:[%s1 + $0x160] sm:$0xff]
    %v701 = vld [vmem:[%s1 + $0x168] sm:$0xff]
    %v702 = vld [vmem:[%s1 + $0x170] sm:$0xff]
    %v703 = vld [vmem:[%s1 + $0x178] sm:$0xff]
    %v704 = vld [vmem:[%s1 + $0x180] sm:$0xff]
    %v705 = vld [vmem:[%s1 + $0x188] sm:$0xff]
    %v706 = vld [vmem:[%s1 + $0x190] sm:$0xff]
    %v707 = vld [vmem:[%s1 + $0x198] sm:$0xff]
    %v708 = vld [vmem:[%s1 + $0x1a0] sm:$0xff]
    %v709 = vld [vmem:[%s1 + $0x1a8] sm:$0xff]
    %v710 = vld [vmem:[%s1 + $0x1b0] sm:$0xff]
    %v711 = vld [vmem:[%s1 + $0x1b8] sm:$0xff]
    %v712 = vld [vmem:[%s1 + $0x1c0] sm:$0xff]
    %v713 = vld [vmem:[%s1 + $0x1c8] sm:$0xff]
    %v714 = vld [vmem:[%s1 + $0x1d0] sm:$0xff]
    %v715 = vld [vmem:[%s1 + $0x1d8] sm:$0xff]
    %v716 = vld [vmem:[%s1 + $0x1e0] sm:$0xff]
    %v717 = vld [vmem:[%s1 + $0x1e8] sm:$0xff]
    %v718 = vld [vmem:[%s1 + $0x1f0] sm:$0xff]
    %v719 = vld [vmem:[%s1 + $0x1f8] sm:$0xff]
    %v720 = vld [vmem:[%s1 + $0x200] sm:$0xff]
    %v721 = vld [vmem:[%s1 + $0x208] sm:$0xff]
    %v722 = vld [vmem:[%s1 + $0x210] sm:$0xff]
    %v723 = vld [vmem:[%s1 + $0x218] sm:$0xff]
    %v724 = vld [vmem:[%s1 + $0x220] sm:$0xff]
    %v725 = vld [vmem:[%s1 + $0x228] sm:$0xff]
    %v726 = vld [vmem:[%s1 + $0x230] sm:$0xff]
    %v727 = vld [vmem:[%s1 + $0x238] sm:$0xff]
    %v728 = vld [vmem:[%s1 + $0x240] sm:$0xff]
    %v729 = vld [vmem:[%s1 + $0x248] sm:$0xff]
    %v730 = vld [vmem:[%s1 + $0x250] sm:$0xff]
    %v731 = vld [vmem:[%s1 + $0x258] sm:$0xff]
    %v732 = vld [vmem:[%s1 + $0x260] sm:$0xff]
    %v733 = vld [vmem:[%s1 + $0x268] sm:$0xff]
    %v734 = vld [vmem:[%s1 + $0x270] sm:$0xff]
    %v735 = vld [vmem:[%s1 + $0x278] sm:$0xff]
    %v736 = vld [vmem:[%s2] sm:$0x1]
    %v738 = vlaneseq
    %v739 = vshrl.u32 %v738, 7
    %v740 = vsub.s32 0, %v739
    %v741 = vrot.slane %v736, %v740
    %v903 = vlaneseq
    %v904 = vand.u32 %v903, 127
    %v905 = vlaneseq
    %v906 = vshrl.u32 %v905, 7
    %v907 = vsub.s32 %v904, %v906
    %v908 = vrot.slane %v178, %v907
    %v909 = vadd.s32 %v904, 4294967288
    %v910 = vlaneseq
    %v911 = vshrl.u32 %v910, 7
    %v912 = vsub.s32 %v909, %v911
    %v913 = vrot.slane %v181, %v912
    %vm914 = vcmask 130112
    %v915 = vsel %vm914, %v913, %v908
    %v916 = vadd.s32 %v904, 4294967280
    %v917 = vlaneseq
    %v918 = vshrl.u32 %v917, 7
    %v919 = vsub.s32 %v916, %v918
    %v920 = vrot.slane %v184, %v919
    %vm921 = vcmask 195712
    %v922 = vsel %vm921, %v920, %v915
    %v923 = vadd.s32 %v904, 4294967272
    %v924 = vlaneseq
    %v925 = vshrl.u32 %v924, 7
    %v926 = vsub.s32 %v923, %v925
    %v927 = vrot.slane %v187, %v926
    %vm928 = vcmask 261312
    %v929 = vsel %vm928, %v927, %v922
    %v930 = vadd.s32 %v904, 4294967264
    %v931 = vlaneseq
    %v932 = vshrl.u32 %v931, 7
    %v933 = vsub.s32 %v930, %v932
    %v934 = vrot.slane %v190, %v933
    %vm935 = vcmask 326912
    %v936 = vsel %vm935, %v934, %v929
    %v937 = vadd.s32 %v904, 4294967256
    %v938 = vlaneseq
    %v939 = vshrl.u32 %v938, 7
    %v940 = vsub.s32 %v937, %v939
    %v941 = vrot.slane %v193, %v940
    %vm942 = vcmask 392512
    %v943 = vsel %vm942, %v941, %v936
    %v944 = vadd.s32 %v904, 4294967248
    %v945 = vlaneseq
    %v946 = vshrl.u32 %v945, 7
    %v947 = vsub.s32 %v944, %v946
    %v948 = vrot.slane %v196, %v947
    %vm949 = vcmask 458112
    %v950 = vsel %vm949, %v948, %v943
    %v951 = vadd.s32 %v904, 4294967240
    %v952 = vlaneseq
    %v953 = vshrl.u32 %v952, 7
    %v954 = vsub.s32 %v951, %v953
    %v955 = vrot.slane %v199, %v954
    %vm956 = vcmask 523712
    %v957 = vsel %vm956, %v955, %v950
    %v958 = vadd.s32 %v904, 4294967232
    %v959 = vlaneseq
    %v960 = vshrl.u32 %v959, 7
    %v961 = vsub.s32 %v958, %v960
    %v962 = vrot.slane %v202, %v961
    %vm963 = vcmask 589312
    %v964 = vsel %vm963, %v962, %v957
    %v965 = vadd.s32 %v904, 4294967224
    %v966 = vlaneseq
    %v967 = vshrl.u32 %v966, 7
    %v968 = vsub.s32 %v965, %v967
    %v969 = vrot.slane %v205, %v968
    %vm970 = vcmask 654912
    %v971 = vsel %vm970, %v969, %v964
    %v972 = vadd.s32 %v904, 4294967216
    %v973 = vlaneseq
    %v974 = vshrl.u32 %v973, 7
    %v975 = vsub.s32 %v972, %v974
    %v976 = vrot.slane %v208, %v975
    %vm977 = vcmask 720512
    %v978 = vsel %vm977, %v976, %v971
    %v979 = vadd.s32 %v904, 4294967208
    %v980 = vlaneseq
    %v981 = vshrl.u32 %v980, 7
    %v982 = vsub.s32 %v979, %v981
    %v983 = vrot.slane %v211, %v982
    %vm984 = vcmask 786112
    %v985 = vsel %vm984, %v983, %v978
    %v986 = vadd.s32 %v904, 4294967200
    %v987 = vlaneseq
    %v988 = vshrl.u32 %v987, 7
    %v989 = vsub.s32 %v986, %v988
    %v990 = vrot.slane %v214, %v989
    %vm991 = vcmask 851712
    %v992 = vsel %vm991, %v990, %v985
    %v993 = vadd.s32 %v904, 4294967192
    %v994 = vlaneseq
    %v995 = vshrl.u32 %v994, 7
    %v996 = vsub.s32 %v993, %v995
    %v997 = vrot.slane %v217, %v996
    %vm998 = vcmask 917312
    %v999 = vsel %vm998, %v997, %v992
    %v1000 = vadd.s32 %v904, 4294967184
    %v1001 = vlaneseq
    %v1002 = vshrl.u32 %v1001, 7
    %v1003 = vsub.s32 %v1000, %v1002
    %v1004 = vrot.slane %v220, %v1003
    %vm1005 = vcmask 982912
    %v1006 = vsel %vm1005, %v1004, %v999
    %v1007 = vadd.s32 %v904, 4294967176
    %v1008 = vlaneseq
    %v1009 = vshrl.u32 %v1008, 7
    %v1010 = vsub.s32 %v1007, %v1009
    %v1011 = vrot.slane %v223, %v1010
    %vm1012 = vcmask 1048512
    %v1013 = vsel %vm1012, %v1011, %v1006
    %v1014 = vlaneseq
    %v1015 = vshrl.u32 %v1014, 7
    %v1016 = vsub.s32 %v904, %v1015
    %v1017 = vrot.slane %v226, %v1016
    %v1018 = vlaneseq
    %v1019 = vshrl.u32 %v1018, 7
    %v1020 = vsub.s32 %v909, %v1019
    %v1021 = vrot.slane %v229, %v1020
    %v1022 = vsel %vm914, %v1021, %v1017
    %v1023 = vlaneseq
    %v1024 = vshrl.u32 %v1023, 7
    %v1025 = vsub.s32 %v916, %v1024
    %v1026 = vrot.slane %v232, %v1025
    %v1027 = vsel %vm921, %v1026, %v1022
    %v1028 = vlaneseq
    %v1029 = vshrl.u32 %v1028, 7
    %v1030 = vsub.s32 %v923, %v1029
    %v1031 = vrot.slane %v235, %v1030
    %v1032 = vsel %vm928, %v1031, %v1027
    %v1033 = vlaneseq
    %v1034 = vshrl.u32 %v1033, 7
    %v1035 = vsub.s32 %v930, %v1034
    %v1036 = vrot.slane %v238, %v1035
    %v1037 = vsel %vm935, %v1036, %v1032
    %v1038 = vlaneseq
    %v1039 = vshrl.u32 %v1038, 7
    %v1040 = vsub.s32 %v937, %v1039
    %v1041 = vrot.slane %v241, %v1040
    %v1042 = vsel %vm942, %v1041, %v1037
    %v1043 = vlaneseq
    %v1044 = vshrl.u32 %v1043, 7
    %v1045 = vsub.s32 %v944, %v1044
    %v1046 = vrot.slane %v244, %v1045
    %v1047 = vsel %vm949, %v1046, %v1042
    %v1048 = vlaneseq
    %v1049 = vshrl.u32 %v1048, 7
    %v1050 = vsub.s32 %v951, %v1049
    %v1051 = vrot.slane %v247, %v1050
    %v1052 = vsel %vm956, %v1051, %v1047
    %v1053 = vlaneseq
    %v1054 = vshrl.u32 %v1053, 7
    %v1055 = vsub.s32 %v958, %v1054
    %v1056 = vrot.slane %v250, %v1055
    %v1057 = vsel %vm963, %v1056, %v1052
    %v1058 = vlaneseq
    %v1059 = vshrl.u32 %v1058, 7
    %v1060 = vsub.s32 %v965, %v1059
    %v1061 = vrot.slane %v253, %v1060
    %v1062 = vsel %vm970, %v1061, %v1057
    %v1063 = vlaneseq
    %v1064 = vshrl.u32 %v1063, 7
    %v1065 = vsub.s32 %v972, %v1064
    %v1066 = vrot.slane %v256, %v1065
    %v1067 = vsel %vm977, %v1066, %v1062
    %v1068 = vlaneseq
    %v1069 = vshrl.u32 %v1068, 7
    %v1070 = vsub.s32 %v979, %v1069
    %v1071 = vrot.slane %v259, %v1070
    %v1072 = vsel %vm984, %v1071, %v1067
    %v1073 = vlaneseq
    %v1074 = vshrl.u32 %v1073, 7
    %v1075 = vsub.s32 %v986, %v1074
    %v1076 = vrot.slane %v262, %v1075
    %v1077 = vsel %vm991, %v1076, %v1072
    %v1078 = vlaneseq
    %v1079 = vshrl.u32 %v1078, 7
    %v1080 = vsub.s32 %v993, %v1079
    %v1081 = vrot.slane %v265, %v1080
    %v1082 = vsel %vm998, %v1081, %v1077
    %v1083 = vlaneseq
    %v1084 = vshrl.u32 %v1083, 7
    %v1085 = vsub.s32 %v1000, %v1084
    %v1086 = vrot.slane %v268, %v1085
    %v1087 = vsel %vm1005, %v1086, %v1082
    %v1088 = vlaneseq
    %v1089 = vshrl.u32 %v1088, 7
    %v1090 = vsub.s32 %v1007, %v1089
    %v1091 = vrot.slane %v271, %v1090
    %v1092 = vsel %vm1012, %v1091, %v1087
    %v1093 = vlaneseq
    %v1094 = vshrl.u32 %v1093, 7
    %v1095 = vsub.s32 %v904, %v1094
    %v1096 = vrot.slane %v274, %v1095
    %v1097 = vlaneseq
    %v1098 = vshrl.u32 %v1097, 7
    %v1099 = vsub.s32 %v909, %v1098
    %v1100 = vrot.slane %v277, %v1099
    %v1101 = vsel %vm914, %v1100, %v1096
    %v1102 = vlaneseq
    %v1103 = vshrl.u32 %v1102, 7
    %v1104 = vsub.s32 %v916, %v1103
    %v1105 = vrot.slane %v280, %v1104
    %v1106 = vsel %vm921, %v1105, %v1101
    %v1107 = vlaneseq
    %v1108 = vshrl.u32 %v1107, 7
    %v1109 = vsub.s32 %v923, %v1108
    %v1110 = vrot.slane %v283, %v1109
    %v1111 = vsel %vm928, %v1110, %v1106
    %v1112 = vlaneseq
    %v1113 = vshrl.u32 %v1112, 7
    %v1114 = vsub.s32 %v930, %v1113
    %v1115 = vrot.slane %v286, %v1114
    %v1116 = vsel %vm935, %v1115, %v1111
    %v1117 = vlaneseq
    %v1118 = vshrl.u32 %v1117, 7
    %v1119 = vsub.s32 %v937, %v1118
    %v1120 = vrot.slane %v289, %v1119
    %v1121 = vsel %vm942, %v1120, %v1116
    %v1122 = vlaneseq
    %v1123 = vshrl.u32 %v1122, 7
    %v1124 = vsub.s32 %v944, %v1123
    %v1125 = vrot.slane %v292, %v1124
    %v1126 = vsel %vm949, %v1125, %v1121
    %v1127 = vlaneseq
    %v1128 = vshrl.u32 %v1127, 7
    %v1129 = vsub.s32 %v951, %v1128
    %v1130 = vrot.slane %v295, %v1129
    %v1131 = vsel %vm956, %v1130, %v1126
    %v1132 = vlaneseq
    %v1133 = vshrl.u32 %v1132, 7
    %v1134 = vsub.s32 %v958, %v1133
    %v1135 = vrot.slane %v298, %v1134
    %v1136 = vsel %vm963, %v1135, %v1131
    %v1137 = vlaneseq
    %v1138 = vshrl.u32 %v1137, 7
    %v1139 = vsub.s32 %v965, %v1138
    %v1140 = vrot.slane %v301, %v1139
    %v1141 = vsel %vm970, %v1140, %v1136
    %v1142 = vlaneseq
    %v1143 = vshrl.u32 %v1142, 7
    %v1144 = vsub.s32 %v972, %v1143
    %v1145 = vrot.slane %v304, %v1144
    %v1146 = vsel %vm977, %v1145, %v1141
    %v1147 = vlaneseq
    %v1148 = vshrl.u32 %v1147, 7
    %v1149 = vsub.s32 %v979, %v1148
    %v1150 = vrot.slane %v307, %v1149
    %v1151 = vsel %vm984, %v1150, %v1146
    %v1152 = vlaneseq
    %v1153 = vshrl.u32 %v1152, 7
    %v1154 = vsub.s32 %v986, %v1153
    %v1155 = vrot.slane %v310, %v1154
    %v1156 = vsel %vm991, %v1155, %v1151
    %v1157 = vlaneseq
    %v1158 = vshrl.u32 %v1157, 7
    %v1159 = vsub.s32 %v993, %v1158
    %v1160 = vrot.slane %v313, %v1159
    %v1161 = vsel %vm998, %v1160, %v1156
    %v1162 = vlaneseq
    %v1163 = vshrl.u32 %v1162, 7
    %v1164 = vsub.s32 %v1000, %v1163
    %v1165 = vrot.slane %v316, %v1164
    %v1166 = vsel %vm1005, %v1165, %v1161
    %v1167 = vlaneseq
    %v1168 = vshrl.u32 %v1167, 7
    %v1169 = vsub.s32 %v1007, %v1168
    %v1170 = vrot.slane %v319, %v1169
    %v1171 = vsel %vm1012, %v1170, %v1166
    %v1172 = vlaneseq
    %v1173 = vshrl.u32 %v1172, 7
    %v1174 = vsub.s32 %v904, %v1173
    %v1175 = vrot.slane %v322, %v1174
    %v1176 = vlaneseq
    %v1177 = vshrl.u32 %v1176, 7
    %v1178 = vsub.s32 %v909, %v1177
    %v1179 = vrot.slane %v325, %v1178
    %v1180 = vsel %vm914, %v1179, %v1175
    %v1181 = vlaneseq
    %v1182 = vshrl.u32 %v1181, 7
    %v1183 = vsub.s32 %v916, %v1182
    %v1184 = vrot.slane %v328, %v1183
    %v1185 = vsel %vm921, %v1184, %v1180
    %v1186 = vlaneseq
    %v1187 = vshrl.u32 %v1186, 7
    %v1188 = vsub.s32 %v923, %v1187
    %v1189 = vrot.slane %v331, %v1188
    %v1190 = vsel %vm928, %v1189, %v1185
    %v1191 = vlaneseq
    %v1192 = vshrl.u32 %v1191, 7
    %v1193 = vsub.s32 %v930, %v1192
    %v1194 = vrot.slane %v334, %v1193
    %v1195 = vsel %vm935, %v1194, %v1190
    %v1196 = vlaneseq
    %v1197 = vshrl.u32 %v1196, 7
    %v1198 = vsub.s32 %v937, %v1197
    %v1199 = vrot.slane %v337, %v1198
    %v1200 = vsel %vm942, %v1199, %v1195
    %v1201 = vlaneseq
    %v1202 = vshrl.u32 %v1201, 7
    %v1203 = vsub.s32 %v944, %v1202
    %v1204 = vrot.slane %v340, %v1203
    %v1205 = vsel %vm949, %v1204, %v1200
    %v1206 = vlaneseq
    %v1207 = vshrl.u32 %v1206, 7
    %v1208 = vsub.s32 %v951, %v1207
    %v1209 = vrot.slane %v343, %v1208
    %v1210 = vsel %vm956, %v1209, %v1205
    %v1211 = vlaneseq
    %v1212 = vshrl.u32 %v1211, 7
    %v1213 = vsub.s32 %v958, %v1212
    %v1214 = vrot.slane %v346, %v1213
    %v1215 = vsel %vm963, %v1214, %v1210
    %v1216 = vlaneseq
    %v1217 = vshrl.u32 %v1216, 7
    %v1218 = vsub.s32 %v965, %v1217
    %v1219 = vrot.slane %v349, %v1218
    %v1220 = vsel %vm970, %v1219, %v1215
    %v1221 = vlaneseq
    %v1222 = vshrl.u32 %v1221, 7
    %v1223 = vsub.s32 %v972, %v1222
    %v1224 = vrot.slane %v352, %v1223
    %v1225 = vsel %vm977, %v1224, %v1220
    %v1226 = vlaneseq
    %v1227 = vshrl.u32 %v1226, 7
    %v1228 = vsub.s32 %v979, %v1227
    %v1229 = vrot.slane %v355, %v1228
    %v1230 = vsel %vm984, %v1229, %v1225
    %v1231 = vlaneseq
    %v1232 = vshrl.u32 %v1231, 7
    %v1233 = vsub.s32 %v986, %v1232
    %v1234 = vrot.slane %v358, %v1233
    %v1235 = vsel %vm991, %v1234, %v1230
    %v1236 = vlaneseq
    %v1237 = vshrl.u32 %v1236, 7
    %v1238 = vsub.s32 %v993, %v1237
    %v1239 = vrot.slane %v361, %v1238
    %v1240 = vsel %vm998, %v1239, %v1235
    %v1241 = vlaneseq
    %v1242 = vshrl.u32 %v1241, 7
    %v1243 = vsub.s32 %v1000, %v1242
    %v1244 = vrot.slane %v364, %v1243
    %v1245 = vsel %vm1005, %v1244, %v1240
    %v1246 = vlaneseq
    %v1247 = vshrl.u32 %v1246, 7
    %v1248 = vsub.s32 %v1007, %v1247
    %v1249 = vrot.slane %v367, %v1248
    %v1250 = vsel %vm1012, %v1249, %v1245
    %v1251 = vlaneseq
    %v1252 = vshrl.u32 %v1251, 7
    %v1253 = vsub.s32 %v904, %v1252
    %v1254 = vrot.slane %v370, %v1253
    %v1255 = vlaneseq
    %v1256 = vshrl.u32 %v1255, 7
    %v1257 = vsub.s32 %v909, %v1256
    %v1258 = vrot.slane %v373, %v1257
    %v1259 = vsel %vm914, %v1258, %v1254
    %v1260 = vlaneseq
    %v1261 = vshrl.u32 %v1260, 7
    %v1262 = vsub.s32 %v916, %v1261
    %v1263 = vrot.slane %v376, %v1262
    %v1264 = vsel %vm921, %v1263, %v1259
    %v1265 = vlaneseq
    %v1266 = vshrl.u32 %v1265, 7
    %v1267 = vsub.s32 %v923, %v1266
    %v1268 = vrot.slane %v379, %v1267
    %v1269 = vsel %vm928, %v1268, %v1264
    %v1270 = vlaneseq
    %v1271 = vshrl.u32 %v1270, 7
    %v1272 = vsub.s32 %v930, %v1271
    %v1273 = vrot.slane %v382, %v1272
    %v1274 = vsel %vm935, %v1273, %v1269
    %v1275 = vlaneseq
    %v1276 = vshrl.u32 %v1275, 7
    %v1277 = vsub.s32 %v937, %v1276
    %v1278 = vrot.slane %v385, %v1277
    %v1279 = vsel %vm942, %v1278, %v1274
    %v1280 = vlaneseq
    %v1281 = vshrl.u32 %v1280, 7
    %v1282 = vsub.s32 %v944, %v1281
    %v1283 = vrot.slane %v388, %v1282
    %v1284 = vsel %vm949, %v1283, %v1279
    %v1285 = vlaneseq
    %v1286 = vshrl.u32 %v1285, 7
    %v1287 = vsub.s32 %v951, %v1286
    %v1288 = vrot.slane %v391, %v1287
    %v1289 = vsel %vm956, %v1288, %v1284
    %v1290 = vlaneseq
    %v1291 = vshrl.u32 %v1290, 7
    %v1292 = vsub.s32 %v958, %v1291
    %v1293 = vrot.slane %v394, %v1292
    %v1294 = vsel %vm963, %v1293, %v1289
    %v1295 = vlaneseq
    %v1296 = vshrl.u32 %v1295, 7
    %v1297 = vsub.s32 %v965, %v1296
    %v1298 = vrot.slane %v397, %v1297
    %v1299 = vsel %vm970, %v1298, %v1294
    %v1300 = vlaneseq
    %v1301 = vshrl.u32 %v1300, 7
    %v1302 = vsub.s32 %v972, %v1301
    %v1303 = vrot.slane %v400, %v1302
    %v1304 = vsel %vm977, %v1303, %v1299
    %v1305 = vlaneseq
    %v1306 = vshrl.u32 %v1305, 7
    %v1307 = vsub.s32 %v979, %v1306
    %v1308 = vrot.slane %v403, %v1307
    %v1309 = vsel %vm984, %v1308, %v1304
    %v1310 = vlaneseq
    %v1311 = vshrl.u32 %v1310, 7
    %v1312 = vsub.s32 %v986, %v1311
    %v1313 = vrot.slane %v406, %v1312
    %v1314 = vsel %vm991, %v1313, %v1309
    %v1315 = vlaneseq
    %v1316 = vshrl.u32 %v1315, 7
    %v1317 = vsub.s32 %v993, %v1316
    %v1318 = vrot.slane %v409, %v1317
    %v1319 = vsel %vm998, %v1318, %v1314
    %v1320 = vlaneseq
    %v1321 = vshrl.u32 %v1320, 7
    %v1322 = vsub.s32 %v1000, %v1321
    %v1323 = vrot.slane %v412, %v1322
    %v1324 = vsel %vm1005, %v1323, %v1319
    %v1325 = vlaneseq
    %v1326 = vshrl.u32 %v1325, 7
    %v1327 = vsub.s32 %v1007, %v1326
    %v1328 = vrot.slane %v415, %v1327
    %v1329 = vsel %vm1012, %v1328, %v1324
    %v1330 = vlaneseq
    %v1331 = vshrl.u32 %v1330, 7
    %v1332 = vsub.s32 %v904, %v1331
    %v1333 = vrot.slane %v418, %v1332
    %v1334 = vlaneseq
    %v1335 = vshrl.u32 %v1334, 7
    %v1336 = vsub.s32 %v909, %v1335
    %v1337 = vrot.slane %v421, %v1336
    %v1338 = vsel %vm914, %v1337, %v1333
    %v1339 = vlaneseq
    %v1340 = vshrl.u32 %v1339, 7
    %v1341 = vsub.s32 %v916, %v1340
    %v1342 = vrot.slane %v424, %v1341
    %v1343 = vsel %vm921, %v1342, %v1338
    %v1344 = vlaneseq
    %v1345 = vshrl.u32 %v1344, 7
    %v1346 = vsub.s32 %v923, %v1345
    %v1347 = vrot.slane %v427, %v1346
    %v1348 = vsel %vm928, %v1347, %v1343
    %v1349 = vlaneseq
    %v1350 = vshrl.u32 %v1349, 7
    %v1351 = vsub.s32 %v930, %v1350
    %v1352 = vrot.slane %v430, %v1351
    %v1353 = vsel %vm935, %v1352, %v1348
    %v1354 = vlaneseq
    %v1355 = vshrl.u32 %v1354, 7
    %v1356 = vsub.s32 %v937, %v1355
    %v1357 = vrot.slane %v433, %v1356
    %v1358 = vsel %vm942, %v1357, %v1353
    %v1359 = vlaneseq
    %v1360 = vshrl.u32 %v1359, 7
    %v1361 = vsub.s32 %v944, %v1360
    %v1362 = vrot.slane %v436, %v1361
    %v1363 = vsel %vm949, %v1362, %v1358
    %v1364 = vlaneseq
    %v1365 = vshrl.u32 %v1364, 7
    %v1366 = vsub.s32 %v951, %v1365
    %v1367 = vrot.slane %v439, %v1366
    %v1368 = vsel %vm956, %v1367, %v1363
    %v1369 = vlaneseq
    %v1370 = vshrl.u32 %v1369, 7
    %v1371 = vsub.s32 %v958, %v1370
    %v1372 = vrot.slane %v442, %v1371
    %v1373 = vsel %vm963, %v1372, %v1368
    %v1374 = vlaneseq
    %v1375 = vshrl.u32 %v1374, 7
    %v1376 = vsub.s32 %v965, %v1375
    %v1377 = vrot.slane %v445, %v1376
    %v1378 = vsel %vm970, %v1377, %v1373
    %v1379 = vlaneseq
    %v1380 = vshrl.u32 %v1379, 7
    %v1381 = vsub.s32 %v972, %v1380
    %v1382 = vrot.slane %v448, %v1381
    %v1383 = vsel %vm977, %v1382, %v1378
    %v1384 = vlaneseq
    %v1385 = vshrl.u32 %v1384, 7
    %v1386 = vsub.s32 %v979, %v1385
    %v1387 = vrot.slane %v451, %v1386
    %v1388 = vsel %vm984, %v1387, %v1383
    %v1389 = vlaneseq
    %v1390 = vshrl.u32 %v1389, 7
    %v1391 = vsub.s32 %v986, %v1390
    %v1392 = vrot.slane %v454, %v1391
    %v1393 = vsel %vm991, %v1392, %v1388
    %v1394 = vlaneseq
    %v1395 = vshrl.u32 %v1394, 7
    %v1396 = vsub.s32 %v993, %v1395
    %v1397 = vrot.slane %v457, %v1396
    %v1398 = vsel %vm998, %v1397, %v1393
    %v1399 = vlaneseq
    %v1400 = vshrl.u32 %v1399, 7
    %v1401 = vsub.s32 %v1000, %v1400
    %v1402 = vrot.slane %v460, %v1401
    %v1403 = vsel %vm1005, %v1402, %v1398
    %v1404 = vlaneseq
    %v1405 = vshrl.u32 %v1404, 7
    %v1406 = vsub.s32 %v1007, %v1405
    %v1407 = vrot.slane %v463, %v1406
    %v1408 = vsel %vm1012, %v1407, %v1403
    %v1409 = vlaneseq
    %v1410 = vshrl.u32 %v1409, 7
    %v1411 = vsub.s32 %v904, %v1410
    %v1412 = vrot.slane %v466, %v1411
    %v1413 = vlaneseq
    %v1414 = vshrl.u32 %v1413, 7
    %v1415 = vsub.s32 %v909, %v1414
    %v1416 = vrot.slane %v469, %v1415
    %v1417 = vsel %vm914, %v1416, %v1412
    %v1418 = vlaneseq
    %v1419 = vshrl.u32 %v1418, 7
    %v1420 = vsub.s32 %v916, %v1419
    %v1421 = vrot.slane %v472, %v1420
    %v1422 = vsel %vm921, %v1421, %v1417
    %v1423 = vlaneseq
    %v1424 = vshrl.u32 %v1423, 7
    %v1425 = vsub.s32 %v923, %v1424
    %v1426 = vrot.slane %v475, %v1425
    %v1427 = vsel %vm928, %v1426, %v1422
    %v1428 = vlaneseq
    %v1429 = vshrl.u32 %v1428, 7
    %v1430 = vsub.s32 %v930, %v1429
    %v1431 = vrot.slane %v478, %v1430
    %v1432 = vsel %vm935, %v1431, %v1427
    %v1433 = vlaneseq
    %v1434 = vshrl.u32 %v1433, 7
    %v1435 = vsub.s32 %v937, %v1434
    %v1436 = vrot.slane %v481, %v1435
    %v1437 = vsel %vm942, %v1436, %v1432
    %v1438 = vlaneseq
    %v1439 = vshrl.u32 %v1438, 7
    %v1440 = vsub.s32 %v944, %v1439
    %v1441 = vrot.slane %v484, %v1440
    %v1442 = vsel %vm949, %v1441, %v1437
    %v1443 = vlaneseq
    %v1444 = vshrl.u32 %v1443, 7
    %v1445 = vsub.s32 %v951, %v1444
    %v1446 = vrot.slane %v487, %v1445
    %v1447 = vsel %vm956, %v1446, %v1442
    %v1448 = vlaneseq
    %v1449 = vshrl.u32 %v1448, 7
    %v1450 = vsub.s32 %v958, %v1449
    %v1451 = vrot.slane %v490, %v1450
    %v1452 = vsel %vm963, %v1451, %v1447
    %v1453 = vlaneseq
    %v1454 = vshrl.u32 %v1453, 7
    %v1455 = vsub.s32 %v965, %v1454
    %v1456 = vrot.slane %v493, %v1455
    %v1457 = vsel %vm970, %v1456, %v1452
    %v1458 = vlaneseq
    %v1459 = vshrl.u32 %v1458, 7
    %v1460 = vsub.s32 %v972, %v1459
    %v1461 = vrot.slane %v496, %v1460
    %v1462 = vsel %vm977, %v1461, %v1457
    %v1463 = vlaneseq
    %v1464 = vshrl.u32 %v1463, 7
    %v1465 = vsub.s32 %v979, %v1464
    %v1466 = vrot.slane %v499, %v1465
    %v1467 = vsel %vm984, %v1466, %v1462
    %v1468 = vlaneseq
    %v1469 = vshrl.u32 %v1468, 7
    %v1470 = vsub.s32 %v986, %v1469
    %v1471 = vrot.slane %v502, %v1470
    %v1472 = vsel %vm991, %v1471, %v1467
    %v1473 = vlaneseq
    %v1474 = vshrl.u32 %v1473, 7
    %v1475 = vsub.s32 %v993, %v1474
    %v1476 = vrot.slane %v505, %v1475
    %v1477 = vsel %vm998, %v1476, %v1472
    %v1478 = vlaneseq
    %v1479 = vshrl.u32 %v1478, 7
    %v1480 = vsub.s32 %v1000, %v1479
    %v1481 = vrot.slane %v508, %v1480
    %v1482 = vsel %vm1005, %v1481, %v1477
    %v1483 = vlaneseq
    %v1484 = vshrl.u32 %v1483, 7
    %v1485 = vsub.s32 %v1007, %v1484
    %v1486 = vrot.slane %v511, %v1485
    %v1487 = vsel %vm1012, %v1486, %v1482
    %v1488 = vlaneseq
    %v1489 = vshrl.u32 %v1488, 7
    %v1490 = vsub.s32 %v904, %v1489
    %v1491 = vrot.slane %v514, %v1490
    %v1492 = vlaneseq
    %v1493 = vshrl.u32 %v1492, 7
    %v1494 = vsub.s32 %v909, %v1493
    %v1495 = vrot.slane %v517, %v1494
    %v1496 = vsel %vm914, %v1495, %v1491
    %v1497 = vlaneseq
    %v1498 = vshrl.u32 %v1497, 7
    %v1499 = vsub.s32 %v916, %v1498
    %v1500 = vrot.slane %v520, %v1499
    %v1501 = vsel %vm921, %v1500, %v1496
    %v1502 = vlaneseq
    %v1503 = vshrl.u32 %v1502, 7
    %v1504 = vsub.s32 %v923, %v1503
    %v1505 = vrot.slane %v523, %v1504
    %v1506 = vsel %vm928, %v1505, %v1501
    %v1507 = vlaneseq
    %v1508 = vshrl.u32 %v1507, 7
    %v1509 = vsub.s32 %v930, %v1508
    %v1510 = vrot.slane %v526, %v1509
    %v1511 = vsel %vm935, %v1510, %v1506
    %v1512 = vlaneseq
    %v1513 = vshrl.u32 %v1512, 7
    %v1514 = vsub.s32 %v937, %v1513
    %v1515 = vrot.slane %v529, %v1514
    %v1516 = vsel %vm942, %v1515, %v1511
    %v1517 = vlaneseq
    %v1518 = vshrl.u32 %v1517, 7
    %v1519 = vsub.s32 %v944, %v1518
    %v1520 = vrot.slane %v532, %v1519
    %v1521 = vsel %vm949, %v1520, %v1516
    %v1522 = vlaneseq
    %v1523 = vshrl.u32 %v1522, 7
    %v1524 = vsub.s32 %v951, %v1523
    %v1525 = vrot.slane %v535, %v1524
    %v1526 = vsel %vm956, %v1525, %v1521
    %v1527 = vlaneseq
    %v1528 = vshrl.u32 %v1527, 7
    %v1529 = vsub.s32 %v958, %v1528
    %v1530 = vrot.slane %v538, %v1529
    %v1531 = vsel %vm963, %v1530, %v1526
    %v1532 = vlaneseq
    %v1533 = vshrl.u32 %v1532, 7
    %v1534 = vsub.s32 %v965, %v1533
    %v1535 = vrot.slane %v541, %v1534
    %v1536 = vsel %vm970, %v1535, %v1531
    %v1537 = vlaneseq
    %v1538 = vshrl.u32 %v1537, 7
    %v1539 = vsub.s32 %v972, %v1538
    %v1540 = vrot.slane %v544, %v1539
    %v1541 = vsel %vm977, %v1540, %v1536
    %v1542 = vlaneseq
    %v1543 = vshrl.u32 %v1542, 7
    %v1544 = vsub.s32 %v979, %v1543
    %v1545 = vrot.slane %v547, %v1544
    %v1546 = vsel %vm984, %v1545, %v1541
    %v1547 = vlaneseq
    %v1548 = vshrl.u32 %v1547, 7
    %v1549 = vsub.s32 %v986, %v1548
    %v1550 = vrot.slane %v550, %v1549
    %v1551 = vsel %vm991, %v1550, %v1546
    %v1552 = vlaneseq
    %v1553 = vshrl.u32 %v1552, 7
    %v1554 = vsub.s32 %v993, %v1553
    %v1555 = vrot.slane %v553, %v1554
    %v1556 = vsel %vm998, %v1555, %v1551
    %v1557 = vlaneseq
    %v1558 = vshrl.u32 %v1557, 7
    %v1559 = vsub.s32 %v1000, %v1558
    %v1560 = vrot.slane %v556, %v1559
    %v1561 = vsel %vm1005, %v1560, %v1556
    %v1562 = vlaneseq
    %v1563 = vshrl.u32 %v1562, 7
    %v1564 = vsub.s32 %v1007, %v1563
    %v1565 = vrot.slane %v559, %v1564
    %v1566 = vsel %vm1012, %v1565, %v1561
    %v1567 = vlaneseq
    %v1568 = vshrl.u32 %v1567, 7
    %v1569 = vsub.s32 %v904, %v1568
    %v1570 = vrot.slane %v562, %v1569
    %v1571 = vlaneseq
    %v1572 = vshrl.u32 %v1571, 7
    %v1573 = vsub.s32 %v909, %v1572
    %v1574 = vrot.slane %v565, %v1573
    %v1575 = vsel %vm914, %v1574, %v1570
    %v1576 = vlaneseq
    %v1577 = vshrl.u32 %v1576, 7
    %v1578 = vsub.s32 %v916, %v1577
    %v1579 = vrot.slane %v568, %v1578
    %v1580 = vsel %vm921, %v1579, %v1575
    %v1581 = vlaneseq
    %v1582 = vshrl.u32 %v1581, 7
    %v1583 = vsub.s32 %v923, %v1582
    %v1584 = vrot.slane %v571, %v1583
    %v1585 = vsel %vm928, %v1584, %v1580
    %v1586 = vlaneseq
    %v1587 = vshrl.u32 %v1586, 7
    %v1588 = vsub.s32 %v930, %v1587
    %v1589 = vrot.slane %v574, %v1588
    %v1590 = vsel %vm935, %v1589, %v1585
    %v1591 = vlaneseq
    %v1592 = vshrl.u32 %v1591, 7
    %v1593 = vsub.s32 %v937, %v1592
    %v1594 = vrot.slane %v577, %v1593
    %v1595 = vsel %vm942, %v1594, %v1590
    %v1596 = vlaneseq
    %v1597 = vshrl.u32 %v1596, 7
    %v1598 = vsub.s32 %v944, %v1597
    %v1599 = vrot.slane %v580, %v1598
    %v1600 = vsel %vm949, %v1599, %v1595
    %v1601 = vlaneseq
    %v1602 = vshrl.u32 %v1601, 7
    %v1603 = vsub.s32 %v951, %v1602
    %v1604 = vrot.slane %v583, %v1603
    %v1605 = vsel %vm956, %v1604, %v1600
    %v1606 = vlaneseq
    %v1607 = vshrl.u32 %v1606, 7
    %v1608 = vsub.s32 %v958, %v1607
    %v1609 = vrot.slane %v586, %v1608
    %v1610 = vsel %vm963, %v1609, %v1605
    %v1611 = vlaneseq
    %v1612 = vshrl.u32 %v1611, 7
    %v1613 = vsub.s32 %v965, %v1612
    %v1614 = vrot.slane %v589, %v1613
    %v1615 = vsel %vm970, %v1614, %v1610
    %v1616 = vlaneseq
    %v1617 = vshrl.u32 %v1616, 7
    %v1618 = vsub.s32 %v972, %v1617
    %v1619 = vrot.slane %v592, %v1618
    %v1620 = vsel %vm977, %v1619, %v1615
    %v1621 = vlaneseq
    %v1622 = vshrl.u32 %v1621, 7
    %v1623 = vsub.s32 %v979, %v1622
    %v1624 = vrot.slane %v595, %v1623
    %v1625 = vsel %vm984, %v1624, %v1620
    %v1626 = vlaneseq
    %v1627 = vshrl.u32 %v1626, 7
    %v1628 = vsub.s32 %v986, %v1627
    %v1629 = vrot.slane %v598, %v1628
    %v1630 = vsel %vm991, %v1629, %v1625
    %v1631 = vlaneseq
    %v1632 = vshrl.u32 %v1631, 7
    %v1633 = vsub.s32 %v993, %v1632
    %v1634 = vrot.slane %v601, %v1633
    %v1635 = vsel %vm998, %v1634, %v1630
    %v1636 = vlaneseq
    %v1637 = vshrl.u32 %v1636, 7
    %v1638 = vsub.s32 %v1000, %v1637
    %v1639 = vrot.slane %v604, %v1638
    %v1640 = vsel %vm1005, %v1639, %v1635
    %v1641 = vlaneseq
    %v1642 = vshrl.u32 %v1641, 7
    %v1643 = vsub.s32 %v1007, %v1642
    %v1644 = vrot.slane %v607, %v1643
    %v1645 = vsel %vm1012, %v1644, %v1640
    %v1646 = vlaneseq
    %v1647 = vshrl.u32 %v1646, 7
    %v1648 = vsub.s32 %v904, %v1647
    %v1649 = vrot.slane %v610, %v1648
    %v1650 = vlaneseq
    %v1651 = vshrl.u32 %v1650, 7
    %v1652 = vsub.s32 %v909, %v1651
    %v1653 = vrot.slane %v613, %v1652
    %v1654 = vsel %vm914, %v1653, %v1649
    %v1655 = vlaneseq
    %v1656 = vshrl.u32 %v1655, 7
    %v1657 = vsub.s32 %v916, %v1656
    %v1658 = vrot.slane %v616, %v1657
    %v1659 = vsel %vm921, %v1658, %v1654
    %v1660 = vlaneseq
    %v1661 = vshrl.u32 %v1660, 7
    %v1662 = vsub.s32 %v923, %v1661
    %v1663 = vrot.slane %v619, %v1662
    %v1664 = vsel %vm928, %v1663, %v1659
    %v1665 = vlaneseq
    %v1666 = vshrl.u32 %v1665, 7
    %v1667 = vsub.s32 %v930, %v1666
    %v1668 = vrot.slane %v622, %v1667
    %v1669 = vsel %vm935, %v1668, %v1664
    %v1670 = vlaneseq
    %v1671 = vshrl.u32 %v1670, 7
    %v1672 = vsub.s32 %v937, %v1671
    %v1673 = vrot.slane %v625, %v1672
    %v1674 = vsel %vm942, %v1673, %v1669
    %v1675 = vlaneseq
    %v1676 = vshrl.u32 %v1675, 7
    %v1677 = vsub.s32 %v944, %v1676
    %v1678 = vrot.slane %v628, %v1677
    %v1679 = vsel %vm949, %v1678, %v1674
    %v1680 = vlaneseq
    %v1681 = vshrl.u32 %v1680, 7
    %v1682 = vsub.s32 %v951, %v1681
    %v1683 = vrot.slane %v631, %v1682
    %v1684 = vsel %vm956, %v1683, %v1679
    %v1685 = vlaneseq
    %v1686 = vshrl.u32 %v1685, 7
    %v1687 = vsub.s32 %v958, %v1686
    %v1688 = vrot.slane %v634, %v1687
    %v1689 = vsel %vm963, %v1688, %v1684
    %v1690 = vlaneseq
    %v1691 = vshrl.u32 %v1690, 7
    %v1692 = vsub.s32 %v965, %v1691
    %v1693 = vrot.slane %v637, %v1692
    %v1694 = vsel %vm970, %v1693, %v1689
    %v1695 = vlaneseq
    %v1696 = vshrl.u32 %v1695, 7
    %v1697 = vsub.s32 %v972, %v1696
    %v1698 = vrot.slane %v640, %v1697
    %v1699 = vsel %vm977, %v1698, %v1694
    %v1700 = vlaneseq
    %v1701 = vshrl.u32 %v1700, 7
    %v1702 = vsub.s32 %v979, %v1701
    %v1703 = vrot.slane %v643, %v1702
    %v1704 = vsel %vm984, %v1703, %v1699
    %v1705 = vlaneseq
    %v1706 = vshrl.u32 %v1705, 7
    %v1707 = vsub.s32 %v986, %v1706
    %v1708 = vrot.slane %v646, %v1707
    %v1709 = vsel %vm991, %v1708, %v1704
    %v1710 = vlaneseq
    %v1711 = vshrl.u32 %v1710, 7
    %v1712 = vsub.s32 %v993, %v1711
    %v1713 = vrot.slane %v649, %v1712
    %v1714 = vsel %vm998, %v1713, %v1709
    %v1715 = vlaneseq
    %v1716 = vshrl.u32 %v1715, 7
    %v1717 = vsub.s32 %v1000, %v1716
    %v1718 = vrot.slane %v652, %v1717
    %v1719 = vsel %vm1005, %v1718, %v1714
    %v1720 = vlaneseq
    %v1721 = vshrl.u32 %v1720, 7
    %v1722 = vsub.s32 %v1007, %v1721
    %v1723 = vrot.slane %v655, %v1722
    %v1724 = vsel %vm1012, %v1723, %v1719
    %vm1725 = vcmask 1041409
    %v1726 = vsel %vm1725, %v1408, %v1013
    %v1727 = vsel %vm1725, %v1487, %v1092
    %v1728 = vsel %vm1725, %v1566, %v1171
    %v1729 = vsel %vm1725, %v1645, %v1250
    %v1730 = vsel %vm1725, %v1724, %v1329
    %1736 = vmatprep.subr.mxu0 0.0
    %1737 = vmatpush1.msra.mxu0 %v656
    %1738 = vmatprep.subr.mxu0 0.0
    %1739 = vmatpush1.msra.mxu0 %v657
    %1740 = vmatprep.subr.mxu0 0.0
    %1741 = vmatpush1.msra.mxu0 %v658
    %1742 = vmatprep.subr.mxu0 0.0
    %1743 = vmatpush1.msra.mxu0 %v659
    %1744 = vmatprep.subr.mxu0 0.0
    %1745 = vmatpush1.msra.mxu0 %v660
    %1746 = vmatprep.subr.mxu0 0.0
    %1747 = vmatpush1.msra.mxu0 %v661
    %1748 = vmatprep.subr.mxu0 0.0
    %1749 = vmatpush1.msra.mxu0 %v662
    %1750 = vmatprep.subr.mxu0 0.0
    %1751 = vmatpush1.msra.mxu0 %v663
    %1752 = vmatprep.subr.mxu0 0.0
    %1753 = vmatpush1.msra.mxu0 %v664
    %1754 = vmatprep.subr.mxu0 0.0
    %1755 = vmatpush1.msra.mxu0 %v665
    %1756 = vmatprep.subr.mxu0 0.0
    %1757 = vmatpush1.msra.mxu0 %v666
    %1758 = vmatprep.subr.mxu0 0.0
    %1759 = vmatpush1.msra.mxu0 %v667
    %1760 = vmatprep.subr.mxu0 0.0
    %1761 = vmatpush1.msra.mxu0 %v668
    %1762 = vmatprep.subr.mxu0 0.0
    %1763 = vmatpush1.msra.mxu0 %v669
    %1764 = vmatprep.subr.mxu0 0.0
    %1765 = vmatpush1.msra.mxu0 %v670
    %1766 = vmatprep.subr.mxu0 0.0
    %1767 = vmatpush1.msra.mxu0 %v671
    %1768 = vmatprep.subr.mxu0 0.0
    %1769 = vmatpush1.msra.mxu0 %v672
    %1770 = vmatprep.subr.mxu0 0.0
    %1771 = vmatpush1.msra.mxu0 %v673
    %1772 = vmatprep.subr.mxu0 0.0
    %1773 = vmatpush1.msra.mxu0 %v674
    %1774 = vmatprep.subr.mxu0 0.0
    %1775 = vmatpush1.msra.mxu0 %v675
    %1776 = vmatprep.subr.mxu0 0.0
    %1777 = vmatpush1.msra.mxu0 %v676
    %1778 = vmatprep.subr.mxu0 0.0
    %1779 = vmatpush1.msra.mxu0 %v677
    %1780 = vmatprep.subr.mxu0 0.0
    %1781 = vmatpush1.msra.mxu0 %v678
    %1782 = vmatprep.subr.mxu0 0.0
    %1783 = vmatpush1.msra.mxu0 %v679
    %1784 = vmatprep.subr.mxu0 0.0
    %1785 = vmatpush1.msra.mxu0 %v680
    %1786 = vmatprep.subr.mxu0 0.0
    %1787 = vmatpush1.msra.mxu0 %v681
    %1788 = vmatprep.subr.mxu0 0.0
    %1789 = vmatpush1.msra.mxu0 %v682
    %1790 = vmatprep.subr.mxu0 0.0
    %1791 = vmatpush1.msra.mxu0 %v683
    %1792 = vmatprep.subr.mxu0 0.0
    %1793 = vmatpush1.msra.mxu0 %v684
    %1794 = vmatprep.subr.mxu0 0.0
    %1795 = vmatpush1.msra.mxu0 %v685
    %1796 = vmatprep.subr.mxu0 0.0
    %1797 = vmatpush1.msra.mxu0 %v686
    %1798 = vmatprep.subr.mxu0 0.0
    %1799 = vmatpush1.msra.mxu0 %v687
    %1800 = vmatprep.mubr.f32.mxu0 %v1727
    %1801 = vmatmul.mubr.f32.gmra.mrb[0].mxu0 %v1726
    %v1802 = vpop.f32.mrb[0].mxu0
    %v1803 = vadd.f32 %v741, %v1802
    %v1804 = vpop.f32.mrb[0].mxu0
    %1805 = vdwg.mxu0
    %1806 = vmatprep.subr.mxu0 0.0
    %1807 = vmatpush1.msra.mxu0 %v688
    %1808 = vmatprep.subr.mxu0 0.0
    %1809 = vmatpush1.msra.mxu0 %v689
    %1810 = vmatprep.subr.mxu0 0.0
    %1811 = vmatpush1.msra.mxu0 %v690
    %1812 = vmatprep.subr.mxu0 0.0
    %1813 = vmatpush1.msra.mxu0 %v691
    %1814 = vmatprep.subr.mxu0 0.0
    %1815 = vmatpush1.msra.mxu0 %v692
    %1816 = vmatprep.subr.mxu0 0.0
    %1817 = vmatpush1.msra.mxu0 %v693
    %1818 = vmatprep.subr.mxu0 0.0
    %1819 = vmatpush1.msra.mxu0 %v694
    %1820 = vmatprep.subr.mxu0 0.0
    %1821 = vmatpush1.msra.mxu0 %v695
    %1822 = vmatprep.subr.mxu0 0.0
    %1823 = vmatpush1.msra.mxu0 %v696
    %1824 = vmatprep.subr.mxu0 0.0
    %1825 = vmatpush1.msra.mxu0 %v697
    %1826 = vmatprep.subr.mxu0 0.0
    %1827 = vmatpush1.msra.mxu0 %v698
    %1828 = vmatprep.subr.mxu0 0.0
    %1829 = vmatpush1.msra.mxu0 %v699
    %1830 = vmatprep.subr.mxu0 0.0
    %1831 = vmatpush1.msra.mxu0 %v700
    %1832 = vmatprep.subr.mxu0 0.0
    %1833 = vmatpush1.msra.mxu0 %v701
    %1834 = vmatprep.subr.mxu0 0.0
    %1835 = vmatpush1.msra.mxu0 %v702
    %1836 = vmatprep.subr.mxu0 0.0
    %1837 = vmatpush1.msra.mxu0 %v703
    %1838 = vmatprep.subr.mxu0 0.0
    %1839 = vmatpush1.msra.mxu0 %v704
    %1840 = vmatprep.subr.mxu0 0.0
    %1841 = vmatpush1.msra.mxu0 %v705
    %1842 = vmatprep.subr.mxu0 0.0
    %1843 = vmatpush1.msra.mxu0 %v706
    %1844 = vmatprep.subr.mxu0 0.0
    %1845 = vmatpush1.msra.mxu0 %v707
    %1846 = vmatprep.subr.mxu0 0.0
    %1847 = vmatpush1.msra.mxu0 %v708
    %1848 = vmatprep.subr.mxu0 0.0
    %1849 = vmatpush1.msra.mxu0 %v709
    %1850 = vmatprep.subr.mxu0 0.0
    %1851 = vmatpush1.msra.mxu0 %v710
    %1852 = vmatprep.subr.mxu0 0.0
    %1853 = vmatpush1.msra.mxu0 %v711
    %1854 = vmatprep.subr.mxu0 0.0
    %1855 = vmatpush1.msra.mxu0 %v712
    %1856 = vmatprep.subr.mxu0 0.0
    %1857 = vmatpush1.msra.mxu0 %v713
    %1858 = vmatprep.subr.mxu0 0.0
    %1859 = vmatpush1.msra.mxu0 %v714
    %1860 = vmatprep.subr.mxu0 0.0
    %1861 = vmatpush1.msra.mxu0 %v715
    %1862 = vmatprep.subr.mxu0 0.0
    %1863 = vmatpush1.msra.mxu0 %v716
    %1864 = vmatprep.subr.mxu0 0.0
    %1865 = vmatpush1.msra.mxu0 %v717
    %1866 = vmatprep.subr.mxu0 0.0
    %1867 = vmatpush1.msra.mxu0 %v718
    %1868 = vmatprep.subr.mxu0 0.0
    %1869 = vmatpush1.msra.mxu0 %v719
    %1870 = vmatprep.mubr.f32.mxu0 %v1729
    %1871 = vmatmul.mubr.f32.gmra.mrb[0].mxu0 %v1728
    %v1872 = vpop.f32.mrb[0].mxu0
    %v1873 = vadd.f32 %v1803, %v1872
    %v1874 = vpop.f32.mrb[0].mxu0
    %1875 = vdwg.mxu0
    %1876 = vmatprep.subr.mxu0 0.0
    %1877 = vmatpush1.msra.mxu0 %v720
    %1878 = vmatprep.subr.mxu0 0.0
    %1879 = vmatpush1.msra.mxu0 %v721
    %1880 = vmatprep.subr.mxu0 0.0
    %1881 = vmatpush1.msra.mxu0 %v722
    %1882 = vmatprep.subr.mxu0 0.0
    %1883 = vmatpush1.msra.mxu0 %v723
    %1884 = vmatprep.subr.mxu0 0.0
    %1885 = vmatpush1.msra.mxu0 %v724
    %1886 = vmatprep.subr.mxu0 0.0
    %1887 = vmatpush1.msra.mxu0 %v725
    %1888 = vmatprep.subr.mxu0 0.0
    %1889 = vmatpush1.msra.mxu0 %v726
    %1890 = vmatprep.subr.mxu0 0.0
    %1891 = vmatpush1.msra.mxu0 %v727
    %1892 = vmatprep.subr.mxu0 0.0
    %1893 = vmatpush1.msra.mxu0 %v728
    %1894 = vmatprep.subr.mxu0 0.0
    %1895 = vmatpush1.msra.mxu0 %v729
    %1896 = vmatprep.subr.mxu0 0.0
    %1897 = vmatpush1.msra.mxu0 %v730
    %1898 = vmatprep.subr.mxu0 0.0
    %1899 = vmatpush1.msra.mxu0 %v731
    %1900 = vmatprep.subr.mxu0 0.0
    %1901 = vmatpush1.msra.mxu0 %v732
    %1902 = vmatprep.subr.mxu0 0.0
    %1903 = vmatpush1.msra.mxu0 %v733
    %1904 = vmatprep.subr.mxu0 0.0
    %1905 = vmatpush1.msra.mxu0 %v734
    %1906 = vmatprep.subr.mxu0 0.0
    %1907 = vmatpush1.msra.mxu0 %v735
    %1908 = vmatprep.subr.mxu0 0.0
    %1909 = vmatpush1.msra.mxu0 0.0
    %1910 = vmatprep.subr.mxu0 0.0
    %1911 = vmatpush1.msra.mxu0 0.0
    %1912 = vmatprep.subr.mxu0 0.0
    %1913 = vmatpush1.msra.mxu0 0.0
    %1914 = vmatprep.subr.mxu0 0.0
    %1915 = vmatpush1.msra.mxu0 0.0
    %1916 = vmatprep.subr.mxu0 0.0
    %1917 = vmatpush1.msra.mxu0 0.0
    %1918 = vmatprep.subr.mxu0 0.0
    %1919 = vmatpush1.msra.mxu0 0.0
    %1920 = vmatprep.subr.mxu0 0.0
    %1921 = vmatpush1.msra.mxu0 0.0
    %1922 = vmatprep.subr.mxu0 0.0
    %1923 = vmatpush1.msra.mxu0 0.0
    %1924 = vmatprep.subr.mxu0 0.0
    %1925 = vmatpush1.msra.mxu0 0.0
    %1926 = vmatprep.subr.mxu0 0.0
    %1927 = vmatpush1.msra.mxu0 0.0
    %1928 = vmatprep.subr.mxu0 0.0
    %1929 = vmatpush1.msra.mxu0 0.0
    %1930 = vmatprep.subr.mxu0 0.0
    %1931 = vmatpush1.msra.mxu0 0.0
    %1932 = vmatprep.subr.mxu0 0.0
    %1933 = vmatpush1.msra.mxu0 0.0
    %1934 = vmatprep.subr.mxu0 0.0
    %1935 = vmatpush1.msra.mxu0 0.0
    %1936 = vmatprep.subr.mxu0 0.0
    %1937 = vmatpush1.msra.mxu0 0.0
    %1938 = vmatprep.subr.mxu0 0.0
    %1939 = vmatpush1.msra.mxu0 0.0
    %1940 = vmatprep.mubr.f32.mxu0 0.0
    %1941 = vmatmul.mubr.f32.gmra.mrb[0].mxu0 %v1730
    %v1942 = vpop.f32.mrb[0].mxu0
    %v1943 = vadd.f32 %v1873, %v1942
    %v1944 = vpop.f32.mrb[0].mxu0
    %1945 = vdwg.mxu0
    %1946 = vst [vmem:[#allocation2] sm:$0x3] %v1943
    // Predicated region
    $region14: #{tpu_custom_call.1} parent=1 // pred_check
      _
    $region15: #{tpu_custom_call.1} parent=1 // pred_check_branch
      %1948 = sbr.rel (0) target = $region17
    $region16: #{tpu_custom_call.1} parent=1 // pred_region
      %s1950 = ssub.s32 32, 32
      %1951 = vsyncadd [#allocation3], %s1950
      %s1953 = sshll.u32 [#allocation2], 4
      %s1954 = int_to_ptr.vmem [resolvable:$true] %s1953
      %1956 = dma.vmem_to_hbm [thread:$0]  %s1954, 32, %s3, [#allocation3]
    $region17: #{tpu_custom_call.1} parent=1 // pred_fallthru
      _
    // Predicated region
    $region18: #{tpu_custom_call.1} parent=1 // pred_check
      _
    $region19: #{tpu_custom_call.1} parent=1 // pred_check_branch
      %1958 = sbr.rel (0) target = $region21
    $region20: #{tpu_custom_call.1} parent=1 // pred_region
      %1959 = dma.done [#allocation3], 32
    $region21: #{tpu_custom_call.1} parent=1 // pred_fallthru
      _
    %1960 = vsyncpa [#allocation3], 1

</llo_original>
